<compile_context>
chip_gen: v6e
topology: v6e:2x2x1
jax: 0.10.0
libtpu: 0.0.40
codegen_flags: <defaults>
</compile_context>

<pallas_src>
import functools

import jax
import jax.numpy as jnp
from jax.experimental import pallas as pl
from jax.experimental.pallas import tpu as pltpu

NUM_CO, NUM_PO, NUM_SHIP, NUM_FLAG = 25, 103, 4, 123
EMB = 300
N3 = 128          # layer-3 width padded 100 -> 128 (lane-dense)
TBL = 256         # 25 + 103 + 4 + 123 = 255 stacked embedding rows, +1 zero pad row
EPS = 1e-5


def mlp_kernel(idx_ref, fx_ref, et_ref,
               w1_ref, w2a_ref, w2b_ref, w3_ref, w4_ref,
               pk_ref, out_ref, *, onehot_dtype):
    B = fx_ref.shape[0]
    inv_b = 1.0 / B

    def bn(x, g, b):
        # nn.BatchNorm1d, training-mode semantics (batch mean, biased variance).
        # One-pass stats: sum and sum-of-squares are independent axis-0 reductions
        # (overlap on the XLU).  var is clamped >= 0 because E[x^2] - mean^2 can go
        # slightly negative in f32 when mean^2 >> var (e.g. post-ReLU activations).
        s1 = jnp.sum(x, axis=0, keepdims=True)
        s2 = jnp.sum(x * x, axis=0, keepdims=True)
        mean = s1 * inv_b
        var = jnp.maximum(s2 * inv_b - mean * mean, 0.0)
        return (x - mean) * jax.lax.rsqrt(var + EPS) * g + b

    # ---- packed per-feature parameter rows (f32), static slices of one ref ----
    b2   = pk_ref[0:1, :]
    b3   = pk_ref[1:2, :N3]
    b4   = pk_ref[2:3, :1]
    g1a  = pk_ref[3:4, :]
    be1a = pk_ref[4:5, :]
    g1b  = pk_ref[5:6, :]
    be1b = pk_ref[6:7, :]
    g2   = pk_ref[7:8, :]
    be2  = pk_ref[8:9, :]
    g3   = pk_ref[9:10, :N3]
    be3  = pk_ref[10:11, :N3]

    # ---- embedding gather + sum as a one-hot matmul on the (otherwise idle) MXU ----
    # one-hot built directly in bf16 on v6e/v7x (values 0..4 are exact); f32 on v5e.
    idx = idx_ref[...]                                           # [B, 4] int32 (pre-offset)
    col = jax.lax.broadcasted_iota(jnp.int32, (B, TBL), 1)
    onehot = ((col == idx[:, 0:1]).astype(onehot_dtype)
              + (col == idx[:, 1:2]).astype(onehot_dtype)
              + (col == idx[:, 2:3]).astype(onehot_dtype)
              + (col == idx[:, 3:4]).astype(onehot_dtype))       # [B, 256], 4 hot entries
    oe = jnp.dot(onehot.astype(jnp.bfloat16), et_ref[...],
                 preferred_element_type=jnp.float32)             # [B, 300] f32

    # ---- layer1: Linear(P1, 300); bias b1 intentionally dropped ----
    # A per-feature constant added before training-mode BN cancels in the mean
    # subtraction, so BN(x@W1 + b1) == BN(x@W1).
    fe = jnp.dot(fx_ref[...].astype(jnp.bfloat16), w1_ref[...],
                 preferred_element_type=jnp.float32)             # [B, 300]

    # ---- batchnorm1 over concat([fe, oe], dim=1) == BN on each 300-wide half ----
    h1a = bn(fe, g1a, be1a)
    h1b = bn(oe, g1b, be1b)

    # ---- layer2: Linear(600, 300), split along the contraction dim ----
    z2 = (jnp.dot(h1a.astype(jnp.bfloat16), w2a_ref[...], preferred_element_type=jnp.float32)
          + jnp.dot(h1b.astype(jnp.bfloat16), w2b_ref[...], preferred_element_type=jnp.float32)
          + b2)
    h2 = bn(jnp.tanh(z2), g2, be2)                               # [B, 300]

    # ---- layer3: Linear(300, 100) padded to 128 lanes + relu + batchnorm3 ----
    z3 = jnp.dot(h2.astype(jnp.bfloat16), w3_ref[...],
                 preferred_element_type=jnp.float32) + b3        # [B, 128]
    h3 = bn(jnp.maximum(z3, 0.0), g3, be3)                       # padded cols stay exactly 0

    # ---- layer4: Linear(100->128 padded, 1) + relu ----
    z4 = jnp.dot(h3.astype(jnp.bfloat16), w4_ref[...],
                 preferred_element_type=jnp.float32) + b4        # [B, 1]
    # TODO(synk): at large B, stage through a lane-dense (1, B) output to avoid
    # 1-of-128-lane masked stores on this [B, 1] writeback.
    out_ref[...] = jnp.maximum(z4, 0.0)


def init_params(key, float_p):
    ks = jax.random.split(key, 8)

    def xavier(k, shape):
        fan_in, fan_out = shape
        limit = (6.0 / (fan_in + fan_out)) ** 0.5
        return jax.random.uniform(k, shape, jnp.float32, -limit, limit)

    def linear(k, fan_in, fan_out):
        kw, kb = jax.random.split(k)
        bound = 1.0 / (fan_in ** 0.5)
        w = jax.random.uniform(kw, (fan_in, fan_out), jnp.float32, -bound, bound)
        b = jax.random.uniform(kb, (fan_out,), jnp.float32, -bound, bound)
        return w, b

    # stacked embedding table [256, 300]: [co | po | ship | flag | 1 zero pad row]
    emb_table = jnp.concatenate([
        xavier(ks[0], (NUM_CO, EMB)),
        xavier(ks[1], (NUM_PO, EMB)),
        xavier(ks[2], (NUM_SHIP, EMB)),
        xavier(ks[3], (NUM_FLAG, EMB)),
        jnp.zeros((TBL - (NUM_CO + NUM_PO + NUM_SHIP + NUM_FLAG), EMB), jnp.float32),
    ], axis=0)

    w1, _b1 = linear(ks[4], float_p, 300)     # b1 dropped (cancels in training-mode BN)
    w2, b2 = linear(ks[5], 600, 300)
    w3, b3 = linear(ks[6], 300, 100)
    w4, b4 = linear(ks[7], 100, 1)

    # pad layer-3/4 to 128 features (padded cols/rows are zero -> results unchanged)
    w3p = jnp.zeros((300, N3), jnp.float32).at[:, :100].set(w3)
    b3p = jnp.zeros((N3,), jnp.float32).at[:100].set(b3)
    w4p = jnp.zeros((N3, 1), jnp.float32).at[:100, :].set(w4)

    g1, be1 = jnp.ones((600,), jnp.float32), jnp.zeros((600,), jnp.float32)
    g2, be2 = jnp.ones((300,), jnp.float32), jnp.zeros((300,), jnp.float32)
    g3, be3 = jnp.ones((100,), jnp.float32), jnp.zeros((100,), jnp.float32)

    # pack all tiny per-feature rows into one f32 [16, 300] array (one DMA in-kernel)
    pk = jnp.zeros((16, EMB), jnp.float32)
    pk = pk.at[0, :].set(b2)
    pk = pk.at[1, :N3].set(b3p)
    pk = pk.at[2, 0].set(b4[0])
    pk = pk.at[3, :].set(g1[:300])
    pk = pk.at[4, :].set(be1[:300])
    pk = pk.at[5, :].set(g1[300:])
    pk = pk.at[6, :].set(be1[300:])
    pk = pk.at[7, :].set(g2)
    pk = pk.at[8, :].set(be2)
    pk = pk.at[9, :100].set(g3)
    pk = pk.at[9, 100:N3].set(1.0)    # pad gamma (value irrelevant: inputs are 0)
    pk = pk.at[10, :100].set(be3)     # pad beta stays 0 so padded features stay 0

    # TODO(synk): on v7x, emb_table / w2a / w2b could be stored fp8 with a per-tensor
    # scale to halve the dominant weight-DMA bytes (validate accuracy first).
    return {
        "emb_table": emb_table.astype(jnp.bfloat16),
        "w1": w1.astype(jnp.bfloat16),
        "w2a": w2[:300, :].astype(jnp.bfloat16),   # pre-split at init, no per-call slices
        "w2b": w2[300:, :].astype(jnp.bfloat16),
        "w3": w3p.astype(jnp.bfloat16),
        "w4": w4p.astype(jnp.bfloat16),
        "pk": pk,
    }


def _vmem_limit_bytes(default_cap=64 * 1024 * 1024):
    # Generation-aware budget: v5e/v6e have 128 MiB VMEM per core, v7x 64 MiB.
    try:
        cap = int(getattr(pltpu.get_tpu_info(), "vmem_capacity_bytes", default_cap))
    except Exception:
        cap = default_cap
    return max(16 * 1024 * 1024, cap - 8 * 1024 * 1024)   # leave ~8 MiB headroom


def _onehot_dtype():
    # v6e/v7x VALUs are bf16-native (build one-hot in bf16); v5e has no bf16 VPU.
    try:
        kind = jax.devices()[0].device_kind.lower()
    except Exception:
        kind = ""
    is_v5e = ("v5 lite" in kind) or ("v5e" in kind) or ("v5litepod" in kind)
    return jnp.float32 if is_v5e else jnp.bfloat16


def _cost_estimate(B, float_p, params):
    # MXU flops (one-hot gather + 4 linears) + rough BN/activation elementwise work.
    flops = 2 * B * (TBL * EMB + float_p * EMB + 600 * EMB + EMB * N3 + N3)
    flops += 30 * B * (600 + 300 + N3)
    transcendentals = B * EMB + 3 * (600 + 300 + N3)          # tanh + per-feature rsqrt
    weight_bytes = sum(int(v.size) * v.dtype.itemsize for v in params.values())
    io_bytes = B * (4 * 4 + float_p * 4 + 4)
    return pl.CostEstimate(flops=int(flops),
                           transcendentals=int(transcendentals),
                           bytes_accessed=int(weight_bytes + io_bytes))


def mlp_forward(float_x, obj_x, params):
    B, float_p = float_x.shape
    # offsets into the stacked embedding table
    off = jnp.array([0, NUM_CO, NUM_CO + NUM_PO, NUM_CO + NUM_PO + NUM_SHIP], jnp.int32)
    idx = obj_x.astype(jnp.int32) + off[None, :]               # [B, 4]

    inputs = [
        idx,
        float_x.astype(jnp.float32),
        params["emb_table"],
        params["w1"], params["w2a"], params["w2b"], params["w3"], params["w4"],
        params["pk"],
    ]

    vmem = pl.BlockSpec(memory_space=pltpu.MemorySpace.VMEM)
    # Single VMEM-resident block: training-mode BatchNorm needs full-batch statistics
    # at three points, so the batch is NOT tiled here (review-sanctioned for moderate B).
    # TODO(synk): for the inference / running-stats variant, fold BN into the adjacent
    # Linears at init, then add grid=(B//TB,) with batch-tiled idx/fx/out specs
    # (index_map lambda i: (i, 0)), constant-index pinned weight specs, and
    # dimension_semantics=("parallel",) so v7x's two TensorCores split the batch.
    # TODO(synk): for the repeated small-B regime, amortize the ~0.6 MB weight DMA
    # across calls (micro-batch grid with pinned weights, or a P10 cross-call prefetch).
    kernel = functools.partial(mlp_kernel, onehot_dtype=_onehot_dtype())
    return pl.pallas_call(
        kernel,
        out_shape=jax.ShapeDtypeStruct((B, 1), jnp.float32),
        in_specs=[vmem] * len(inputs),
        out_specs=vmem,
        compiler_params=pltpu.CompilerParams(vmem_limit_bytes=_vmem_limit_bytes()),
        cost_estimate=_cost_estimate(B, float_p, params),
    )(*inputs)


if __name__ == "__main__":
    B, FLOAT_P, OBJ_P = 8, 16, 4

    key = jax.random.PRNGKey(0)
    k_params, k_fx, k0, k1, k2, k3 = jax.random.split(key, 6)

    params = init_params(k_params, FLOAT_P)

    float_x = jax.random.normal(k_fx, (B, FLOAT_P), jnp.float32)
    obj_x = jnp.concatenate([
        jax.random.randint(k0, (B, 1), 0, NUM_CO),
        jax.random.randint(k1, (B, 1), 0, NUM_PO),
        jax.random.randint(k2, (B, 1), 0, NUM_SHIP),
        jax.random.randint(k3, (B, 1), 0, NUM_FLAG),
    ], axis=1).astype(jnp.int32)                               # [B, 4]

    out = mlp_forward(float_x, obj_x, params)
    jax.block_until_ready(out)
    assert out.shape == (B, 1) and out.dtype == jnp.float32
    assert bool(jnp.isfinite(out).all())
    assert bool((out >= 0.0).all())        # final ReLU
    print("KERNEL_OK")
</pallas_src>

<mosaic_0001>
module attributes {stable_mosaic.version = 11 : i64} {
  func.func @mlp_kernel(%arg0: memref<8x4xi32, #tpu.memory_space<vmem>>, %arg1: memref<8x16xf32, #tpu.memory_space<vmem>>, %arg2: memref<256x300xbf16, #tpu.memory_space<vmem>>, %arg3: memref<16x300xbf16, #tpu.memory_space<vmem>>, %arg4: memref<300x300xbf16, #tpu.memory_space<vmem>>, %arg5: memref<300x300xbf16, #tpu.memory_space<vmem>>, %arg6: memref<300x128xbf16, #tpu.memory_space<vmem>>, %arg7: memref<128x1xbf16, #tpu.memory_space<vmem>>, %arg8: memref<16x300xf32, #tpu.memory_space<vmem>>, %arg9: memref<8x1xf32, #tpu.memory_space<vmem>>) attributes {dimension_semantics = [], scalar_prefetch = 0 : i64, scratch_operands = 0 : i64, tpu.core_type = #tpu.core_type<tc>} {
    %c0 = arith.constant 0 : index
    %c0_0 = arith.constant 0 : index
    %0 = vector.load %arg8[%c0, %c0_0] : memref<16x300xf32, #tpu.memory_space<vmem>>, vector<1x300xf32>
    %c1 = arith.constant 1 : index
    %c0_1 = arith.constant 0 : index
    %1 = vector.load %arg8[%c1, %c0_1] : memref<16x300xf32, #tpu.memory_space<vmem>>, vector<1x128xf32>
    %c2 = arith.constant 2 : index
    %c0_2 = arith.constant 0 : index
    %2 = vector.load %arg8[%c2, %c0_2] : memref<16x300xf32, #tpu.memory_space<vmem>>, vector<1x1xf32>
    %c3 = arith.constant 3 : index
    %c0_3 = arith.constant 0 : index
    %3 = vector.load %arg8[%c3, %c0_3] : memref<16x300xf32, #tpu.memory_space<vmem>>, vector<1x300xf32>
    %c4 = arith.constant 4 : index
    %c0_4 = arith.constant 0 : index
    %4 = vector.load %arg8[%c4, %c0_4] : memref<16x300xf32, #tpu.memory_space<vmem>>, vector<1x300xf32>
    %c5 = arith.constant 5 : index
    %c0_5 = arith.constant 0 : index
    %5 = vector.load %arg8[%c5, %c0_5] : memref<16x300xf32, #tpu.memory_space<vmem>>, vector<1x300xf32>
    %c6 = arith.constant 6 : index
    %c0_6 = arith.constant 0 : index
    %6 = vector.load %arg8[%c6, %c0_6] : memref<16x300xf32, #tpu.memory_space<vmem>>, vector<1x300xf32>
    %c7 = arith.constant 7 : index
    %c0_7 = arith.constant 0 : index
    %7 = vector.load %arg8[%c7, %c0_7] : memref<16x300xf32, #tpu.memory_space<vmem>>, vector<1x300xf32>
    %c8 = arith.constant 8 : index
    %c0_8 = arith.constant 0 : index
    %8 = vector.load %arg8[%c8, %c0_8] : memref<16x300xf32, #tpu.memory_space<vmem>>, vector<1x300xf32>
    %c9 = arith.constant 9 : index
    %c0_9 = arith.constant 0 : index
    %9 = vector.load %arg8[%c9, %c0_9] : memref<16x300xf32, #tpu.memory_space<vmem>>, vector<1x128xf32>
    %c10 = arith.constant 10 : index
    %c0_10 = arith.constant 0 : index
    %10 = vector.load %arg8[%c10, %c0_10] : memref<16x300xf32, #tpu.memory_space<vmem>>, vector<1x128xf32>
    %c0_11 = arith.constant 0 : index
    %c0_12 = arith.constant 0 : index
    %11 = vector.load %arg0[%c0_11, %c0_12] : memref<8x4xi32, #tpu.memory_space<vmem>>, vector<8x4xi32>
    %12 = tpu.iota {dimensions = array<i32: 1>} : vector<8x256xi32>
    %13 = vector.extract_strided_slice %11 {offsets = [0, 0], sizes = [8, 1], strides = [1, 1]} : vector<8x4xi32> to vector<8x1xi32>
    %14 = vector.broadcast %13 : vector<8x1xi32> to vector<8x256xi32>
    %15 = arith.cmpi eq, %12, %14 : vector<8x256xi32>
    %16 = arith.extui %15 : vector<8x256xi1> to vector<8x256xi32>
    %17 = arith.sitofp %16 : vector<8x256xi32> to vector<8x256xf32>
    %18 = arith.truncf %17 : vector<8x256xf32> to vector<8x256xbf16>
    %19 = vector.extract_strided_slice %11 {offsets = [0, 1], sizes = [8, 1], strides = [1, 1]} : vector<8x4xi32> to vector<8x1xi32>
    %20 = vector.broadcast %19 : vector<8x1xi32> to vector<8x256xi32>
    %21 = arith.cmpi eq, %12, %20 : vector<8x256xi32>
    %22 = arith.extui %21 : vector<8x256xi1> to vector<8x256xi32>
    %23 = arith.sitofp %22 : vector<8x256xi32> to vector<8x256xf32>
    %24 = arith.truncf %23 : vector<8x256xf32> to vector<8x256xbf16>
    %25 = arith.addf %18, %24 : vector<8x256xbf16>
    %26 = vector.extract_strided_slice %11 {offsets = [0, 2], sizes = [8, 1], strides = [1, 1]} : vector<8x4xi32> to vector<8x1xi32>
    %27 = vector.broadcast %26 : vector<8x1xi32> to vector<8x256xi32>
    %28 = arith.cmpi eq, %12, %27 : vector<8x256xi32>
    %29 = arith.extui %28 : vector<8x256xi1> to vector<8x256xi32>
    %30 = arith.sitofp %29 : vector<8x256xi32> to vector<8x256xf32>
    %31 = arith.truncf %30 : vector<8x256xf32> to vector<8x256xbf16>
    %32 = arith.addf %25, %31 : vector<8x256xbf16>
    %33 = vector.extract_strided_slice %11 {offsets = [0, 3], sizes = [8, 1], strides = [1, 1]} : vector<8x4xi32> to vector<8x1xi32>
    %34 = vector.broadcast %33 : vector<8x1xi32> to vector<8x256xi32>
    %35 = arith.cmpi eq, %12, %34 : vector<8x256xi32>
    %36 = arith.extui %35 : vector<8x256xi1> to vector<8x256xi32>
    %37 = arith.sitofp %36 : vector<8x256xi32> to vector<8x256xf32>
    %38 = arith.truncf %37 : vector<8x256xf32> to vector<8x256xbf16>
    %39 = arith.addf %32, %38 : vector<8x256xbf16>
    %c0_13 = arith.constant 0 : index
    %c0_14 = arith.constant 0 : index
    %40 = vector.load %arg2[%c0_13, %c0_14] : memref<256x300xbf16, #tpu.memory_space<vmem>>, vector<256x300xbf16>
    %cst = arith.constant dense<0.000000e+00> : vector<8x300xf32>
    %41 = tpu.matmul %39, %40, %cst {dimension_numbers = #tpu.dot_dimension_numbers<[1], [0], [0], [1], [0, 0, 1, 1], [], []>} : vector<8x256xbf16>, vector<256x300xbf16>, vector<8x300xf32> -> vector<8x300xf32>
    %c0_15 = arith.constant 0 : index
    %c0_16 = arith.constant 0 : index
    %42 = vector.load %arg1[%c0_15, %c0_16] : memref<8x16xf32, #tpu.memory_space<vmem>>, vector<8x16xf32>
    %43 = arith.truncf %42 : vector<8x16xf32> to vector<8x16xbf16>
    %c0_17 = arith.constant 0 : index
    %c0_18 = arith.constant 0 : index
    %44 = vector.load %arg3[%c0_17, %c0_18] : memref<16x300xbf16, #tpu.memory_space<vmem>>, vector<16x300xbf16>
    %cst_19 = arith.constant dense<0.000000e+00> : vector<8x300xf32>
    %45 = tpu.matmul %43, %44, %cst_19 {dimension_numbers = #tpu.dot_dimension_numbers<[1], [0], [0], [1], [0, 0, 1, 1], [], []>} : vector<8x16xbf16>, vector<16x300xbf16>, vector<8x300xf32> -> vector<8x300xf32>
    %cst_20 = arith.constant dense<0.000000e+00> : vector<300xf32>
    %46 = vector.multi_reduction <add>, %45, %cst_20 [0] : vector<8x300xf32> to vector<300xf32>
    %47 = vector.shape_cast %46 : vector<300xf32> to vector<1x300xf32>
    %48 = arith.mulf %45, %45 : vector<8x300xf32>
    %cst_21 = arith.constant dense<0.000000e+00> : vector<300xf32>
    %49 = vector.multi_reduction <add>, %48, %cst_21 [0] : vector<8x300xf32> to vector<300xf32>
    %50 = vector.shape_cast %49 : vector<300xf32> to vector<1x300xf32>
    %cst_22 = arith.constant 1.250000e-01 : f32
    %51 = vector.broadcast %cst_22 : f32 to vector<1x300xf32>
    %52 = arith.mulf %47, %51 : vector<1x300xf32>
    %cst_23 = arith.constant 1.250000e-01 : f32
    %53 = vector.broadcast %cst_23 : f32 to vector<1x300xf32>
    %54 = arith.mulf %50, %53 : vector<1x300xf32>
    %55 = arith.mulf %52, %52 : vector<1x300xf32>
    %56 = arith.subf %54, %55 : vector<1x300xf32>
    %cst_24 = arith.constant 0.000000e+00 : f32
    %57 = vector.broadcast %cst_24 : f32 to vector<1x300xf32>
    %58 = arith.maximumf %56, %57 : vector<1x300xf32>
    %59 = vector.broadcast %52 : vector<1x300xf32> to vector<8x300xf32>
    %60 = arith.subf %45, %59 : vector<8x300xf32>
    %cst_25 = arith.constant 9.99999974E-6 : f32
    %61 = vector.broadcast %cst_25 : f32 to vector<1x300xf32>
    %62 = arith.addf %58, %61 : vector<1x300xf32>
    %63 = math.rsqrt %62 : vector<1x300xf32>
    %64 = vector.broadcast %63 : vector<1x300xf32> to vector<8x300xf32>
    %65 = arith.mulf %60, %64 : vector<8x300xf32>
    %66 = vector.broadcast %3 : vector<1x300xf32> to vector<8x300xf32>
    %67 = arith.mulf %65, %66 : vector<8x300xf32>
    %68 = vector.broadcast %4 : vector<1x300xf32> to vector<8x300xf32>
    %69 = arith.addf %67, %68 : vector<8x300xf32>
    %cst_26 = arith.constant dense<0.000000e+00> : vector<300xf32>
    %70 = vector.multi_reduction <add>, %41, %cst_26 [0] : vector<8x300xf32> to vector<300xf32>
    %71 = vector.shape_cast %70 : vector<300xf32> to vector<1x300xf32>
    %72 = arith.mulf %41, %41 : vector<8x300xf32>
    %cst_27 = arith.constant dense<0.000000e+00> : vector<300xf32>
    %73 = vector.multi_reduction <add>, %72, %cst_27 [0] : vector<8x300xf32> to vector<300xf32>
    %74 = vector.shape_cast %73 : vector<300xf32> to vector<1x300xf32>
    %cst_28 = arith.constant 1.250000e-01 : f32
    %75 = vector.broadcast %cst_28 : f32 to vector<1x300xf32>
    %76 = arith.mulf %71, %75 : vector<1x300xf32>
    %cst_29 = arith.constant 1.250000e-01 : f32
    %77 = vector.broadcast %cst_29 : f32 to vector<1x300xf32>
    %78 = arith.mulf %74, %77 : vector<1x300xf32>
    %79 = arith.mulf %76, %76 : vector<1x300xf32>
    %80 = arith.subf %78, %79 : vector<1x300xf32>
    %cst_30 = arith.constant 0.000000e+00 : f32
    %81 = vector.broadcast %cst_30 : f32 to vector<1x300xf32>
    %82 = arith.maximumf %80, %81 : vector<1x300xf32>
    %83 = vector.broadcast %76 : vector<1x300xf32> to vector<8x300xf32>
    %84 = arith.subf %41, %83 : vector<8x300xf32>
    %cst_31 = arith.constant 9.99999974E-6 : f32
    %85 = vector.broadcast %cst_31 : f32 to vector<1x300xf32>
    %86 = arith.addf %82, %85 : vector<1x300xf32>
    %87 = math.rsqrt %86 : vector<1x300xf32>
    %88 = vector.broadcast %87 : vector<1x300xf32> to vector<8x300xf32>
    %89 = arith.mulf %84, %88 : vector<8x300xf32>
    %90 = vector.broadcast %5 : vector<1x300xf32> to vector<8x300xf32>
    %91 = arith.mulf %89, %90 : vector<8x300xf32>
    %92 = vector.broadcast %6 : vector<1x300xf32> to vector<8x300xf32>
    %93 = arith.addf %91, %92 : vector<8x300xf32>
    %94 = arith.truncf %69 : vector<8x300xf32> to vector<8x300xbf16>
    %c0_32 = arith.constant 0 : index
    %c0_33 = arith.constant 0 : index
    %95 = vector.load %arg4[%c0_32, %c0_33] : memref<300x300xbf16, #tpu.memory_space<vmem>>, vector<300x300xbf16>
    %cst_34 = arith.constant dense<0.000000e+00> : vector<8x300xf32>
    %96 = tpu.matmul %94, %95, %cst_34 {dimension_numbers = #tpu.dot_dimension_numbers<[1], [0], [0], [1], [0, 0, 1, 1], [], []>} : vector<8x300xbf16>, vector<300x300xbf16>, vector<8x300xf32> -> vector<8x300xf32>
    %97 = arith.truncf %93 : vector<8x300xf32> to vector<8x300xbf16>
    %c0_35 = arith.constant 0 : index
    %c0_36 = arith.constant 0 : index
    %98 = vector.load %arg5[%c0_35, %c0_36] : memref<300x300xbf16, #tpu.memory_space<vmem>>, vector<300x300xbf16>
    %cst_37 = arith.constant dense<0.000000e+00> : vector<8x300xf32>
    %99 = tpu.matmul %97, %98, %cst_37 {dimension_numbers = #tpu.dot_dimension_numbers<[1], [0], [0], [1], [0, 0, 1, 1], [], []>} : vector<8x300xbf16>, vector<300x300xbf16>, vector<8x300xf32> -> vector<8x300xf32>
    %100 = arith.addf %96, %99 : vector<8x300xf32>
    %101 = vector.broadcast %0 : vector<1x300xf32> to vector<8x300xf32>
    %102 = arith.addf %100, %101 : vector<8x300xf32>
    %103 = math.tanh %102 : vector<8x300xf32>
    %cst_38 = arith.constant dense<0.000000e+00> : vector<300xf32>
    %104 = vector.multi_reduction <add>, %103, %cst_38 [0] : vector<8x300xf32> to vector<300xf32>
    %105 = vector.shape_cast %104 : vector<300xf32> to vector<1x300xf32>
    %106 = arith.mulf %103, %103 : vector<8x300xf32>
    %cst_39 = arith.constant dense<0.000000e+00> : vector<300xf32>
    %107 = vector.multi_reduction <add>, %106, %cst_39 [0] : vector<8x300xf32> to vector<300xf32>
    %108 = vector.shape_cast %107 : vector<300xf32> to vector<1x300xf32>
    %cst_40 = arith.constant 1.250000e-01 : f32
    %109 = vector.broadcast %cst_40 : f32 to vector<1x300xf32>
    %110 = arith.mulf %105, %109 : vector<1x300xf32>
    %cst_41 = arith.constant 1.250000e-01 : f32
    %111 = vector.broadcast %cst_41 : f32 to vector<1x300xf32>
    %112 = arith.mulf %108, %111 : vector<1x300xf32>
    %113 = arith.mulf %110, %110 : vector<1x300xf32>
    %114 = arith.subf %112, %113 : vector<1x300xf32>
    %cst_42 = arith.constant 0.000000e+00 : f32
    %115 = vector.broadcast %cst_42 : f32 to vector<1x300xf32>
    %116 = arith.maximumf %114, %115 : vector<1x300xf32>
    %117 = vector.broadcast %110 : vector<1x300xf32> to vector<8x300xf32>
    %118 = arith.subf %103, %117 : vector<8x300xf32>
    %cst_43 = arith.constant 9.99999974E-6 : f32
    %119 = vector.broadcast %cst_43 : f32 to vector<1x300xf32>
    %120 = arith.addf %116, %119 : vector<1x300xf32>
    %121 = math.rsqrt %120 : vector<1x300xf32>
    %122 = vector.broadcast %121 : vector<1x300xf32> to vector<8x300xf32>
    %123 = arith.mulf %118, %122 : vector<8x300xf32>
    %124 = vector.broadcast %7 : vector<1x300xf32> to vector<8x300xf32>
    %125 = arith.mulf %123, %124 : vector<8x300xf32>
    %126 = vector.broadcast %8 : vector<1x300xf32> to vector<8x300xf32>
    %127 = arith.addf %125, %126 : vector<8x300xf32>
    %128 = arith.truncf %127 : vector<8x300xf32> to vector<8x300xbf16>
    %c0_44 = arith.constant 0 : index
    %c0_45 = arith.constant 0 : index
    %129 = vector.load %arg6[%c0_44, %c0_45] : memref<300x128xbf16, #tpu.memory_space<vmem>>, vector<300x128xbf16>
    %cst_46 = arith.constant dense<0.000000e+00> : vector<8x128xf32>
    %130 = tpu.matmul %128, %129, %cst_46 {dimension_numbers = #tpu.dot_dimension_numbers<[1], [0], [0], [1], [0, 0, 1, 1], [], []>} : vector<8x300xbf16>, vector<300x128xbf16>, vector<8x128xf32> -> vector<8x128xf32>
    %131 = vector.broadcast %1 : vector<1x128xf32> to vector<8x128xf32>
    %132 = arith.addf %130, %131 : vector<8x128xf32>
    %cst_47 = arith.constant 0.000000e+00 : f32
    %133 = vector.broadcast %cst_47 : f32 to vector<8x128xf32>
    %134 = arith.maximumf %132, %133 : vector<8x128xf32>
    %cst_48 = arith.constant dense<0.000000e+00> : vector<128xf32>
    %135 = vector.multi_reduction <add>, %134, %cst_48 [0] : vector<8x128xf32> to vector<128xf32>
    %136 = vector.shape_cast %135 : vector<128xf32> to vector<1x128xf32>
    %137 = arith.mulf %134, %134 : vector<8x128xf32>
    %cst_49 = arith.constant dense<0.000000e+00> : vector<128xf32>
    %138 = vector.multi_reduction <add>, %137, %cst_49 [0] : vector<8x128xf32> to vector<128xf32>
    %139 = vector.shape_cast %138 : vector<128xf32> to vector<1x128xf32>
    %cst_50 = arith.constant 1.250000e-01 : f32
    %140 = vector.broadcast %cst_50 : f32 to vector<1x128xf32>
    %141 = arith.mulf %136, %140 : vector<1x128xf32>
    %cst_51 = arith.constant 1.250000e-01 : f32
    %142 = vector.broadcast %cst_51 : f32 to vector<1x128xf32>
    %143 = arith.mulf %139, %142 : vector<1x128xf32>
    %144 = arith.mulf %141, %141 : vector<1x128xf32>
    %145 = arith.subf %143, %144 : vector<1x128xf32>
    %cst_52 = arith.constant 0.000000e+00 : f32
    %146 = vector.broadcast %cst_52 : f32 to vector<1x128xf32>
    %147 = arith.maximumf %145, %146 : vector<1x128xf32>
    %148 = vector.broadcast %141 : vector<1x128xf32> to vector<8x128xf32>
    %149 = arith.subf %134, %148 : vector<8x128xf32>
    %cst_53 = arith.constant 9.99999974E-6 : f32
    %150 = vector.broadcast %cst_53 : f32 to vector<1x128xf32>
    %151 = arith.addf %147, %150 : vector<1x128xf32>
    %152 = math.rsqrt %151 : vector<1x128xf32>
    %153 = vector.broadcast %152 : vector<1x128xf32> to vector<8x128xf32>
    %154 = arith.mulf %149, %153 : vector<8x128xf32>
    %155 = vector.broadcast %9 : vector<1x128xf32> to vector<8x128xf32>
    %156 = arith.mulf %154, %155 : vector<8x128xf32>
    %157 = vector.broadcast %10 : vector<1x128xf32> to vector<8x128xf32>
    %158 = arith.addf %156, %157 : vector<8x128xf32>
    %159 = arith.truncf %158 : vector<8x128xf32> to vector<8x128xbf16>
    %c0_54 = arith.constant 0 : index
    %c0_55 = arith.constant 0 : index
    %160 = vector.load %arg7[%c0_54, %c0_55] : memref<128x1xbf16, #tpu.memory_space<vmem>>, vector<128x1xbf16>
    %cst_56 = arith.constant dense<0.000000e+00> : vector<8x1xf32>
    %161 = tpu.matmul %159, %160, %cst_56 {dimension_numbers = #tpu.dot_dimension_numbers<[1], [0], [0], [1], [0, 0, 1, 1], [], []>} : vector<8x128xbf16>, vector<128x1xbf16>, vector<8x1xf32> -> vector<8x1xf32>
    %162 = vector.broadcast %2 : vector<1x1xf32> to vector<8x1xf32>
    %163 = arith.addf %161, %162 : vector<8x1xf32>
    %cst_57 = arith.constant 0.000000e+00 : f32
    %164 = vector.broadcast %cst_57 : f32 to vector<8x1xf32>
    %165 = arith.maximumf %163, %164 : vector<8x1xf32>
    %c0_58 = arith.constant 0 : index
    %c0_59 = arith.constant 0 : index
    %166 = vector.load %arg9[%c0_58, %c0_59] : memref<8x1xf32, #tpu.memory_space<vmem>>, vector<8x1xf32>
    tpu.vector_store %arg9[%c0_58, %c0_59], %165 {strides = array<i32>} : memref<8x1xf32, #tpu.memory_space<vmem>>, vector<8x1xf32>,
    return
  }
}

</mosaic_0001>

<llo_original>
// kernel: tpu_custom_call.1
$region0: #{tpu_custom_call.1}
  #allocation0 [shape = 'u32[]', space=smem, size = 0x4, offset = 0x4, fixed_abs, tag = 'smem constant byte address 0x4 - core index']
  #allocation1 [shape = 'u32[144,128]{1,0:T(1,128)}', space=vmem, size = 0x12000, scoped, tag = 'internal scratch']
  %s0 = inlined_call_operand.vmem [shape: s32[8,4], index: 0, kind: input, shape index: {}]
  %s1 = inlined_call_operand.vmem [shape: f32[8,16], index: 1, kind: input, shape index: {}]
  %s2 = inlined_call_operand.vmem [shape: bf16[256,300], index: 2, kind: input, shape index: {}]
  %s3 = inlined_call_operand.vmem [shape: bf16[16,300], index: 3, kind: input, shape index: {}]
  %s4 = inlined_call_operand.vmem [shape: bf16[300,300], index: 4, kind: input, shape index: {}]
  %s5 = inlined_call_operand.hbm [shape: bf16[300,300], index: 5, kind: input, shape index: {}]
  %s6 = inlined_call_operand.vmem [shape: bf16[300,128], index: 6, kind: input, shape index: {}]
  %s7 = inlined_call_operand.vmem [shape: bf16[128,1], index: 7, kind: input, shape index: {}]
  %s8 = inlined_call_operand.vmem [shape: f32[16,300], index: 8, kind: input, shape index: {}]
  %s9 = inlined_call_operand.vmem [shape: f32[8,1], index: 9, kind: output, shape index: {}]
  %s10 = sld [smem:[#allocation0]]
  $region50: #{tpu_custom_call.1} parent=0
    _
  %s12 = ssub.s32 1, %s10
  %s13 = scalar_select 0, %s12, %s10
  $region1: #{tpu_custom_call.1} parent=0
    #allocation2 [shape = 'u8[233472]{0}', space=vmem, size = 0x39000, scoped, tag = 'input window, operand 5, single buffered']
    #allocation3 [shape = 's32[1]{0}', space=sflag, size = 0x4, scoped, tag = 'scoped memory for tpu_custom_call.1']
    %14 = vsyncpa [#allocation3], 0
    // Predicated region
    $region2: #{tpu_custom_call.1} parent=1 // pred_check
      _
    $region3: #{tpu_custom_call.1} parent=1 // pred_check_branch
      %16 = sbr.rel (0) target = $region5
    $region4: #{tpu_custom_call.1} parent=1 // pred_region
      _
    $region5: #{tpu_custom_call.1} parent=1 // pred_fallthru
      _
    // Predicated region
    $region6: #{tpu_custom_call.1} parent=1 // pred_check
      _
    $region7: #{tpu_custom_call.1} parent=1 // pred_check_branch
      %18 = sbr.rel (0) target = $region9
    $region8: #{tpu_custom_call.1} parent=1 // pred_region
      _
    $region9: #{tpu_custom_call.1} parent=1 // pred_fallthru
      _
    // Predicated region
    $region10: #{tpu_custom_call.1} parent=1 // pred_check
      _
    $region11: #{tpu_custom_call.1} parent=1 // pred_check_branch
      %20 = sbr.rel (0) target = $region13
    $region12: #{tpu_custom_call.1} parent=1 // pred_region
      _
    $region13: #{tpu_custom_call.1} parent=1 // pred_fallthru
      _
    // Predicated region
    $region14: #{tpu_custom_call.1} parent=1 // pred_check
      _
    $region15: #{tpu_custom_call.1} parent=1 // pred_check_branch
      %22 = sbr.rel (0) target = $region17
    $region16: #{tpu_custom_call.1} parent=1 // pred_region
      _
    $region17: #{tpu_custom_call.1} parent=1 // pred_fallthru
      _
    // Predicated region
    $region18: #{tpu_custom_call.1} parent=1 // pred_check
      _
    $region19: #{tpu_custom_call.1} parent=1 // pred_check_branch
      %24 = sbr.rel (0) target = $region21
    $region20: #{tpu_custom_call.1} parent=1 // pred_region
      _
    $region21: #{tpu_custom_call.1} parent=1 // pred_fallthru
      _
    // Predicated region
    $region22: #{tpu_custom_call.1} parent=1 // pred_check
      _
    $region23: #{tpu_custom_call.1} parent=1 // pred_check_branch
      %26 = sbr.rel (0) target = $region25
    $region24: #{tpu_custom_call.1} parent=1 // pred_region
      %s28 = ssub.s32 7296, 7296
      %29 = vsyncadd [#allocation3], %s28
      %s30 = sshll.u32 [#allocation2], 4
      %s31 = int_to_ptr.vmem [resolvable:$true] %s30
      %36 = dma.hbm_to_vmem [thread:$0]  %s5, 7296, %s31, [#allocation3], 192, 192, 12
    $region25: #{tpu_custom_call.1} parent=1 // pred_fallthru
      _
    // Predicated region
    $region26: #{tpu_custom_call.1} parent=1 // pred_check
      _
    $region27: #{tpu_custom_call.1} parent=1 // pred_check_branch
      %38 = sbr.rel (0) target = $region29
    $region28: #{tpu_custom_call.1} parent=1 // pred_region
      _
    $region29: #{tpu_custom_call.1} parent=1 // pred_fallthru
      _
    // Predicated region
    $region30: #{tpu_custom_call.1} parent=1 // pred_check
      _
    $region31: #{tpu_custom_call.1} parent=1 // pred_check_branch
      %40 = sbr.rel (0) target = $region33
    $region32: #{tpu_custom_call.1} parent=1 // pred_region
      _
    $region33: #{tpu_custom_call.1} parent=1 // pred_fallthru
      _
    // Predicated region
    $region34: #{tpu_custom_call.1} parent=1 // pred_check
      _
    $region35: #{tpu_custom_call.1} parent=1 // pred_check_branch
      %42 = sbr.rel (0) target = $region37
    $region36: #{tpu_custom_call.1} parent=1 // pred_region
      _
    $region37: #{tpu_custom_call.1} parent=1 // pred_fallthru
      _
    // Predicated region
    $region38: #{tpu_custom_call.1} parent=1 // pred_check
      _
    $region39: #{tpu_custom_call.1} parent=1 // pred_check_branch
      %44 = sbr.rel (0) target = $region41
    $region40: #{tpu_custom_call.1} parent=1 // pred_region
      %45 = dma.done [#allocation3], 7296
    $region41: #{tpu_custom_call.1} parent=1 // pred_fallthru
      _
    %v47 = vld [vmem:[%s8] ss:$8 sm:$0x7]
    %v48 = vld [vmem:[%s8 + $0x1] ss:$0 sm:$0xff]
    %v49 = vld [vmem:[%s8 + $0x2] ss:$0 sm:$0xff]
    %s50 = scalar_lea.vmem %s8, 3
    %v51 = vld [vmem:[%s50] ss:$8 sm:$0x7]
    %s52 = scalar_lea.vmem %s8, 4
    %v53 = vld [vmem:[%s52] ss:$8 sm:$0x7]
    %s54 = scalar_lea.vmem %s8, 5
    %v55 = vld [vmem:[%s54] ss:$8 sm:$0x7]
    %s56 = scalar_lea.vmem %s8, 6
    %v57 = vld [vmem:[%s56] ss:$8 sm:$0x7]
    %s58 = scalar_lea.vmem %s8, 7
    %v59 = vld [vmem:[%s58] ss:$8 sm:$0x7]
    %s60 = scalar_lea.vmem %s8, 24
    %v61 = vld [vmem:[%s60] ss:$8 sm:$0x7]
    %v62 = vld [vmem:[%s8 + $0x19] ss:$0 sm:$0xff]
    %v63 = vld [vmem:[%s8 + $0x1a] ss:$0 sm:$0xff]
    %v64 = vld [vmem:[%s0] sm:$0xff]
    %v65 = vlaneseq
    %v66 = vand.u32 %v65, 127
    %v67 = vadd.s32 %v66, 128
    %68 = vset.pattern.permute.xlu0 0
    %69 = vperm.xlu0 %68, %v64
    %v70 = vpop.permute.xlu0 %69
    %vm71 = vcmp.eq.s32.totalorder %v66, %v70
    %vm72 = vcmp.eq.s32.totalorder %v67, %v70
    %v73 = vsel %vm71, 1, 0
    %v74 = vsel %vm72, 1, 0
    %v75 = vcvt.s32.f32 %v73
    %v76 = vcvt.s32.f32 %v74
    %v77 = vpack.c.bf16 %v75, %v75
    %v78 = vpack.c.bf16 %v76, %v76
    %79 = vset.pattern.permute.xlu0 1
    %80 = vperm.xlu0 %79, %v64
    %v81 = vpop.permute.xlu0 %80
    %vm82 = vcmp.eq.s32.totalorder %v66, %v81
    %vm83 = vcmp.eq.s32.totalorder %v67, %v81
    %v84 = vsel %vm82, 1, 0
    %v85 = vsel %vm83, 1, 0
    %v86 = vcvt.s32.f32 %v84
    %v87 = vcvt.s32.f32 %v85
    %v88 = vpack.c.bf16 %v86, %v86
    %v89 = vpack.c.bf16 %v87, %v87
    %v90 = vadd.bf16 %v77, %v88
    %v91 = vadd.bf16 %v78, %v89
    %92 = vset.pattern.permute.xlu0 2
    %93 = vperm.xlu0 %92, %v64
    %v94 = vpop.permute.xlu0 %93
    %vm95 = vcmp.eq.s32.totalorder %v66, %v94
    %vm96 = vcmp.eq.s32.totalorder %v67, %v94
    %v97 = vsel %vm95, 1, 0
    %v98 = vsel %vm96, 1, 0
    %v99 = vcvt.s32.f32 %v97
    %v100 = vcvt.s32.f32 %v98
    %v101 = vpack.c.bf16 %v99, %v99
    %v102 = vpack.c.bf16 %v100, %v100
    %v103 = vadd.bf16 %v90, %v101
    %v104 = vadd.bf16 %v91, %v102
    %105 = vset.pattern.permute.xlu0 3
    %106 = vperm.xlu0 %105, %v64
    %v107 = vpop.permute.xlu0 %106
    %vm108 = vcmp.eq.s32.totalorder %v66, %v107
    %vm109 = vcmp.eq.s32.totalorder %v67, %v107
    %v110 = vsel %vm108, 1, 0
    %v111 = vsel %vm109, 1, 0
    %v112 = vcvt.s32.f32 %v110
    %v113 = vcvt.s32.f32 %v111
    %v114 = vpack.c.bf16 %v112, %v112
    %v115 = vpack.c.bf16 %v113, %v113
    %v116 = vadd.bf16 %v103, %v114
    %v117 = vadd.bf16 %v104, %v115
    %v118 = vld [vmem:[%s2] sm:$0xff]
    %v119 = vld [vmem:[%s2 + $0x8] sm:$0xf]
    %v120 = vld [vmem:[%s2 + $0xc] sm:$0xff]
    %v121 = vld [vmem:[%s2 + $0x14] sm:$0xf]
    %v122 = vld [vmem:[%s2 + $0x18] sm:$0xff]
    %v123 = vld [vmem:[%s2 + $0x20] sm:$0xf]
    %v124 = vld [vmem:[%s2 + $0x24] sm:$0xff]
    %v125 = vld [vmem:[%s2 + $0x2c] sm:$0xf]
    %v126 = vld [vmem:[%s2 + $0x30] sm:$0xff]
    %v127 = vld [vmem:[%s2 + $0x38] sm:$0xf]
    %v128 = vld [vmem:[%s2 + $0x3c] sm:$0xff]
    %v129 = vld [vmem:[%s2 + $0x44] sm:$0xf]
    %v130 = vld [vmem:[%s2 + $0x48] sm:$0xff]
    %v131 = vld [vmem:[%s2 + $0x50] sm:$0xf]
    %v132 = vld [vmem:[%s2 + $0x54] sm:$0xff]
    %v133 = vld [vmem:[%s2 + $0x5c] sm:$0xf]
    %v134 = vld [vmem:[%s2 + $0x60] sm:$0xff]
    %v135 = vld [vmem:[%s2 + $0x68] sm:$0xf]
    %v136 = vld [vmem:[%s2 + $0x6c] sm:$0xff]
    %v137 = vld [vmem:[%s2 + $0x74] sm:$0xf]
    %v138 = vld [vmem:[%s2 + $0x78] sm:$0xff]
    %v139 = vld [vmem:[%s2 + $0x80] sm:$0xf]
    %v140 = vld [vmem:[%s2 + $0x84] sm:$0xff]
    %v141 = vld [vmem:[%s2 + $0x8c] sm:$0xf]
    %v142 = vld [vmem:[%s2 + $0x90] sm:$0xff]
    %v143 = vld [vmem:[%s2 + $0x98] sm:$0xf]
    %v144 = vld [vmem:[%s2 + $0x9c] sm:$0xff]
    %v145 = vld [vmem:[%s2 + $0xa4] sm:$0xf]
    %v146 = vld [vmem:[%s2 + $0xa8] sm:$0xff]
    %v147 = vld [vmem:[%s2 + $0xb0] sm:$0xf]
    %v148 = vld [vmem:[%s2 + $0xb4] sm:$0xff]
    %v149 = vld [vmem:[%s2 + $0xbc] sm:$0xf]
    %v150 = vld [vmem:[%s2 + $0xc0] sm:$0xff]
    %v151 = vld [vmem:[%s2 + $0xc8] sm:$0xf]
    %v152 = vld [vmem:[%s2 + $0xcc] sm:$0xff]
    %v153 = vld [vmem:[%s2 + $0xd4] sm:$0xf]
    %v154 = vld [vmem:[%s2 + $0xd8] sm:$0xff]
    %v155 = vld [vmem:[%s2 + $0xe0] sm:$0xf]
    %v156 = vld [vmem:[%s2 + $0xe4] sm:$0xff]
    %v157 = vld [vmem:[%s2 + $0xec] sm:$0xf]
    %v158 = vld [vmem:[%s2 + $0xf0] sm:$0xff]
    %v159 = vld [vmem:[%s2 + $0xf8] sm:$0xf]
    %v160 = vld [vmem:[%s2 + $0xfc] sm:$0xff]
    %v161 = vld [vmem:[%s2 + $0x104] sm:$0xf]
    %v162 = vld [vmem:[%s2 + $0x108] sm:$0xff]
    %v163 = vld [vmem:[%s2 + $0x110] sm:$0xf]
    %v164 = vld [vmem:[%s2 + $0x114] sm:$0xff]
    %v165 = vld [vmem:[%s2 + $0x11c] sm:$0xf]
    %v166 = vld [vmem:[%s2 + $0x120] sm:$0xff]
    %v167 = vld [vmem:[%s2 + $0x128] sm:$0xf]
    %v168 = vld [vmem:[%s2 + $0x12c] sm:$0xff]
    %v169 = vld [vmem:[%s2 + $0x134] sm:$0xf]
    %v170 = vld [vmem:[%s2 + $0x138] sm:$0xff]
    %v171 = vld [vmem:[%s2 + $0x140] sm:$0xf]
    %v172 = vld [vmem:[%s2 + $0x144] sm:$0xff]
    %v173 = vld [vmem:[%s2 + $0x14c] sm:$0xf]
    %v174 = vld [vmem:[%s2 + $0x150] sm:$0xff]
    %v175 = vld [vmem:[%s2 + $0x158] sm:$0xf]
    %v176 = vld [vmem:[%s2 + $0x15c] sm:$0xff]
    %v177 = vld [vmem:[%s2 + $0x164] sm:$0xf]
    %v178 = vld [vmem:[%s2 + $0x168] sm:$0xff]
    %v179 = vld [vmem:[%s2 + $0x170] sm:$0xf]
    %v180 = vld [vmem:[%s2 + $0x174] sm:$0xff]
    %v181 = vld [vmem:[%s2 + $0x17c] sm:$0xf]
    %v246 = vunpack.c.l.b16 %v118
    %v247 = vunpack.c.h.b16 %v118
    %v248 = vunpack.c.l.b16 %v119
    %v249 = vunpack.c.l.b16 %v120
    %v250 = vunpack.c.h.b16 %v120
    %v251 = vunpack.c.l.b16 %v121
    %v252 = vunpack.c.l.b16 %v122
    %v253 = vunpack.c.h.b16 %v122
    %v254 = vunpack.c.l.b16 %v123
    %v255 = vunpack.c.l.b16 %v124
    %v256 = vunpack.c.h.b16 %v124
    %v257 = vunpack.c.l.b16 %v125
    %v258 = vunpack.c.l.b16 %v126
    %v259 = vunpack.c.h.b16 %v126
    %v260 = vunpack.c.l.b16 %v127
    %v261 = vunpack.c.l.b16 %v128
    %v262 = vunpack.c.h.b16 %v128
    %v263 = vunpack.c.l.b16 %v129
    %v264 = vunpack.c.l.b16 %v130
    %v265 = vunpack.c.h.b16 %v130
    %v266 = vunpack.c.l.b16 %v131
    %v267 = vunpack.c.l.b16 %v132
    %v268 = vunpack.c.h.b16 %v132
    %v269 = vunpack.c.l.b16 %v133
    %v270 = vunpack.c.l.b16 %v134
    %v271 = vunpack.c.h.b16 %v134
    %v272 = vunpack.c.l.b16 %v135
    %v273 = vunpack.c.l.b16 %v136
    %v274 = vunpack.c.h.b16 %v136
    %v275 = vunpack.c.l.b16 %v137
    %v276 = vunpack.c.l.b16 %v138
    %v277 = vunpack.c.h.b16 %v138
    %v278 = vunpack.c.l.b16 %v139
    %v279 = vunpack.c.l.b16 %v140
    %v280 = vunpack.c.h.b16 %v140
    %v281 = vunpack.c.l.b16 %v141
    %v282 = vunpack.c.l.b16 %v142
    %v283 = vunpack.c.h.b16 %v142
    %v284 = vunpack.c.l.b16 %v143
    %v285 = vunpack.c.l.b16 %v144
    %v286 = vunpack.c.h.b16 %v144
    %v287 = vunpack.c.l.b16 %v145
    %v288 = vunpack.c.l.b16 %v146
    %v289 = vunpack.c.h.b16 %v146
    %v290 = vunpack.c.l.b16 %v147
    %v291 = vunpack.c.l.b16 %v148
    %v292 = vunpack.c.h.b16 %v148
    %v293 = vunpack.c.l.b16 %v149
    %v294 = vunpack.c.l.b16 %v150
    %v295 = vunpack.c.h.b16 %v150
    %v296 = vunpack.c.l.b16 %v151
    %v297 = vunpack.c.l.b16 %v152
    %v298 = vunpack.c.h.b16 %v152
    %v299 = vunpack.c.l.b16 %v153
    %v300 = vunpack.c.l.b16 %v154
    %v301 = vunpack.c.h.b16 %v154
    %v302 = vunpack.c.l.b16 %v155
    %v303 = vunpack.c.l.b16 %v156
    %v304 = vunpack.c.h.b16 %v156
    %v305 = vunpack.c.l.b16 %v157
    %v306 = vunpack.c.l.b16 %v158
    %v307 = vunpack.c.h.b16 %v158
    %v308 = vunpack.c.l.b16 %v159
    %v309 = vunpack.c.l.b16 %v160
    %v310 = vunpack.c.h.b16 %v160
    %v311 = vunpack.c.l.b16 %v161
    %v312 = vunpack.c.l.b16 %v162
    %v313 = vunpack.c.h.b16 %v162
    %v314 = vunpack.c.l.b16 %v163
    %v315 = vunpack.c.l.b16 %v164
    %v316 = vunpack.c.h.b16 %v164
    %v317 = vunpack.c.l.b16 %v165
    %v318 = vunpack.c.l.b16 %v166
    %v319 = vunpack.c.h.b16 %v166
    %v320 = vunpack.c.l.b16 %v167
    %v321 = vunpack.c.l.b16 %v168
    %v322 = vunpack.c.h.b16 %v168
    %v323 = vunpack.c.l.b16 %v169
    %v324 = vunpack.c.l.b16 %v170
    %v325 = vunpack.c.h.b16 %v170
    %v326 = vunpack.c.l.b16 %v171
    %v327 = vunpack.c.l.b16 %v172
    %v328 = vunpack.c.h.b16 %v172
    %v329 = vunpack.c.l.b16 %v173
    %v330 = vunpack.c.l.b16 %v174
    %v331 = vunpack.c.h.b16 %v174
    %v332 = vunpack.c.l.b16 %v175
    %v333 = vunpack.c.l.b16 %v176
    %v334 = vunpack.c.h.b16 %v176
    %v335 = vunpack.c.l.b16 %v177
    %v336 = vunpack.c.l.b16 %v178
    %v337 = vunpack.c.h.b16 %v178
    %v338 = vunpack.c.l.b16 %v179
    %v339 = vunpack.c.l.b16 %v180
    %v340 = vunpack.c.h.b16 %v180
    %v341 = vunpack.c.l.b16 %v181
    %v342 = vpack.c.b16 %v249, %v246
    %v343 = vpack.c.b16 %v250, %v247
    %v344 = vpack.c.b16 %v251, %v248
    %v345 = vpack.c.b16 %v255, %v252
    %v346 = vpack.c.b16 %v256, %v253
    %v347 = vpack.c.b16 %v257, %v254
    %v348 = vpack.c.b16 %v261, %v258
    %v349 = vpack.c.b16 %v262, %v259
    %v350 = vpack.c.b16 %v263, %v260
    %v351 = vpack.c.b16 %v267, %v264
    %v352 = vpack.c.b16 %v268, %v265
    %v353 = vpack.c.b16 %v269, %v266
    %v354 = vpack.c.b16 %v273, %v270
    %v355 = vpack.c.b16 %v274, %v271
    %v356 = vpack.c.b16 %v275, %v272
    %v357 = vpack.c.b16 %v279, %v276
    %v358 = vpack.c.b16 %v280, %v277
    %v359 = vpack.c.b16 %v281, %v278
    %v360 = vpack.c.b16 %v285, %v282
    %v361 = vpack.c.b16 %v286, %v283
    %v362 = vpack.c.b16 %v287, %v284
    %v363 = vpack.c.b16 %v291, %v288
    %v364 = vpack.c.b16 %v292, %v289
    %v365 = vpack.c.b16 %v293, %v290
    %v366 = vpack.c.b16 %v297, %v294
    %v367 = vpack.c.b16 %v298, %v295
    %v368 = vpack.c.b16 %v299, %v296
    %v369 = vpack.c.b16 %v303, %v300
    %v370 = vpack.c.b16 %v304, %v301
    %v371 = vpack.c.b16 %v305, %v302
    %v372 = vpack.c.b16 %v309, %v306
    %v373 = vpack.c.b16 %v310, %v307
    %v374 = vpack.c.b16 %v311, %v308
    %v375 = vpack.c.b16 %v315, %v312
    %v376 = vpack.c.b16 %v316, %v313
    %v377 = vpack.c.b16 %v317, %v314
    %v378 = vpack.c.b16 %v321, %v318
    %v379 = vpack.c.b16 %v322, %v319
    %v380 = vpack.c.b16 %v323, %v320
    %v381 = vpack.c.b16 %v327, %v324
    %v382 = vpack.c.b16 %v328, %v325
    %v383 = vpack.c.b16 %v329, %v326
    %v384 = vpack.c.b16 %v333, %v330
    %v385 = vpack.c.b16 %v334, %v331
    %v386 = vpack.c.b16 %v335, %v332
    %v387 = vpack.c.b16 %v339, %v336
    %v388 = vpack.c.b16 %v340, %v337
    %v389 = vpack.c.b16 %v341, %v338
    %438 = vmatprep.subr.bf16.mxu0 %v364
    %439 = vmatpush1.bf16.msra.mxu0 %v363
    %440 = vmatprep.subr.bf16.mxu0 %v361
    %441 = vmatpush1.bf16.msra.mxu0 %v360
    %442 = vmatprep.subr.bf16.mxu0 %v358
    %443 = vmatpush1.bf16.msra.mxu0 %v357
    %444 = vmatprep.subr.bf16.mxu0 %v355
    %445 = vmatpush1.bf16.msra.mxu0 %v354
    %446 = vmatprep.subr.bf16.mxu0 %v352
    %447 = vmatpush1.bf16.msra.mxu0 %v351
    %448 = vmatprep.subr.bf16.mxu0 %v349
    %449 = vmatpush1.bf16.msra.mxu0 %v348
    %450 = vmatprep.subr.bf16.mxu0 %v346
    %451 = vmatpush1.bf16.msra.mxu0 %v345
    %452 = vmatprep.subr.bf16.mxu0 %v343
    %453 = vmatpush1.bf16.msra.mxu0 %v342
    %454 = vmatprep.subr.bf16.mxu0 %v388
    %455 = vmatpush2.bf16.msra.mxu0 %v387
    %456 = vmatprep.subr.bf16.mxu0 %v385
    %457 = vmatpush2.bf16.msra.mxu0 %v384
    %458 = vmatprep.subr.bf16.mxu0 %v382
    %459 = vmatpush2.bf16.msra.mxu0 %v381
    %460 = vmatprep.subr.bf16.mxu0 %v379
    %461 = vmatpush2.bf16.msra.mxu0 %v378
    %462 = vmatprep.subr.bf16.mxu0 %v376
    %463 = vmatpush2.bf16.msra.mxu0 %v375
    %464 = vmatprep.subr.bf16.mxu0 %v373
    %465 = vmatpush2.bf16.msra.mxu0 %v372
    %466 = vmatprep.subr.bf16.mxu0 %v370
    %467 = vmatpush2.bf16.msra.mxu0 %v369
    %468 = vmatprep.subr.bf16.mxu0 %v367
    %469 = vmatpush2.bf16.msra.mxu0 %v366
    %470 = vmatprep.mubr.bf16.mxu0 %v117
    %471 = vmatmul.mubr.bf16.gmra.mxu0 %v116
    %v472 = vpop.f32.mrf.mxu0
    %v473 = vadd.f32 0.0, %v472
    %v474 = vpop.f32.mrf.mxu0
    %v475 = vadd.f32 0.0, %v474
    %v476 = vpop.f32.mrf.mxu0
    %v477 = vpop.f32.mrf.mxu0
    %478 = vdwg.mxu0
    %479 = vmatprep.subr.bf16.mxu0 0
    %480 = vmatpush1.bf16.msra.mxu0 %v365
    %481 = vmatprep.subr.bf16.mxu0 0
    %482 = vmatpush1.bf16.msra.mxu0 %v362
    %483 = vmatprep.subr.bf16.mxu0 0
    %484 = vmatpush1.bf16.msra.mxu0 %v359
    %485 = vmatprep.subr.bf16.mxu0 0
    %486 = vmatpush1.bf16.msra.mxu0 %v356
    %487 = vmatprep.subr.bf16.mxu0 0
    %488 = vmatpush1.bf16.msra.mxu0 %v353
    %489 = vmatprep.subr.bf16.mxu0 0
    %490 = vmatpush1.bf16.msra.mxu0 %v350
    %491 = vmatprep.subr.bf16.mxu0 0
    %492 = vmatpush1.bf16.msra.mxu0 %v347
    %493 = vmatprep.subr.bf16.mxu0 0
    %494 = vmatpush1.bf16.msra.mxu0 %v344
    %495 = vmatprep.subr.bf16.mxu0 0
    %496 = vmatpush2.bf16.msra.mxu0 %v389
    %497 = vmatprep.subr.bf16.mxu0 0
    %498 = vmatpush2.bf16.msra.mxu0 %v386
    %499 = vmatprep.subr.bf16.mxu0 0
    %500 = vmatpush2.bf16.msra.mxu0 %v383
    %501 = vmatprep.subr.bf16.mxu0 0
    %502 = vmatpush2.bf16.msra.mxu0 %v380
    %503 = vmatprep.subr.bf16.mxu0 0
    %504 = vmatpush2.bf16.msra.mxu0 %v377
    %505 = vmatprep.subr.bf16.mxu0 0
    %506 = vmatpush2.bf16.msra.mxu0 %v374
    %507 = vmatprep.subr.bf16.mxu0 0
    %508 = vmatpush2.bf16.msra.mxu0 %v371
    %509 = vmatprep.subr.bf16.mxu0 0
    %510 = vmatpush2.bf16.msra.mxu0 %v368
    %511 = vmatprep.mubr.bf16.mxu0 %v117
    %512 = vmatmul.mubr.bf16.gmra.mxu0 %v116
    %v513 = vpop.f32.mrf.mxu0
    %v514 = vadd.f32 0.0, %v513
    %v515 = vpop.f32.mrf.mxu0
    %v516 = vpop.f32.mrf.mxu0
    %v517 = vpop.f32.mrf.mxu0
    %518 = vdwg.mxu0
    %v519 = vld [vmem:[%s1] sm:$0xff]
    %v520 = vpack.c.bf16 %v519, %v519
    %v521 = vld [vmem:[%s3] sm:$0xff]
    %v522 = vld [vmem:[%s3 + $0x8] sm:$0xf]
    %v523 = vld [vmem:[%s3 + $0xc] sm:$0xff]
    %v524 = vld [vmem:[%s3 + $0x14] sm:$0xf]
    %v529 = vunpack.c.l.b16 %v521
    %v530 = vunpack.c.h.b16 %v521
    %v531 = vunpack.c.l.b16 %v522
    %v532 = vunpack.c.l.b16 %v523
    %v533 = vunpack.c.h.b16 %v523
    %v534 = vunpack.c.l.b16 %v524
    %v535 = vpack.c.b16 %v532, %v529
    %v536 = vpack.c.b16 %v533, %v530
    %v537 = vpack.c.b16 %v534, %v531
    %vm541 = vcmask 130048
    %v543 = vsel %vm541, %v520, 0
    %545 = vmatprep.subr.bf16.mxu0 0
    %546 = vmatpush1.bf16.msra.mxu0 0
    %547 = vmatprep.subr.bf16.mxu0 0
    %548 = vmatpush1.bf16.msra.mxu0 0
    %549 = vmatprep.subr.bf16.mxu0 0
    %550 = vmatpush1.bf16.msra.mxu0 0
    %551 = vmatprep.subr.bf16.mxu0 0
    %552 = vmatpush1.bf16.msra.mxu0 0
    %553 = vmatprep.subr.bf16.mxu0 0
    %554 = vmatpush1.bf16.msra.mxu0 0
    %555 = vmatprep.subr.bf16.mxu0 0
    %556 = vmatpush1.bf16.msra.mxu0 0
    %557 = vmatprep.subr.bf16.mxu0 0
    %558 = vmatpush1.bf16.msra.mxu0 0
    %559 = vmatprep.subr.bf16.mxu0 %v536
    %560 = vmatpush1.bf16.msra.mxu0 %v535
    %561 = vmatprep.subr.bf16.mxu0 0
    %562 = vmatpush2.bf16.msra.mxu0 0
    %563 = vmatprep.subr.bf16.mxu0 0
    %564 = vmatpush2.bf16.msra.mxu0 0
    %565 = vmatprep.subr.bf16.mxu0 0
    %566 = vmatpush2.bf16.msra.mxu0 0
    %567 = vmatprep.subr.bf16.mxu0 0
    %568 = vmatpush2.bf16.msra.mxu0 0
    %569 = vmatprep.subr.bf16.mxu0 0
    %570 = vmatpush2.bf16.msra.mxu0 0
    %571 = vmatprep.subr.bf16.mxu0 0
    %572 = vmatpush2.bf16.msra.mxu0 0
    %573 = vmatprep.subr.bf16.mxu0 0
    %574 = vmatpush2.bf16.msra.mxu0 0
    %575 = vmatprep.subr.bf16.mxu0 0
    %576 = vmatpush2.bf16.msra.mxu0 0
    %577 = vmatprep.mubr.bf16.mxu0 0
    %578 = vmatmul.mubr.bf16.gmra.mxu0 %v543
    %v579 = vpop.f32.mrf.mxu0
    %v580 = vadd.f32 0.0, %v579
    %v581 = vpop.f32.mrf.mxu0
    %v582 = vadd.f32 0.0, %v581
    %v583 = vpop.f32.mrf.mxu0
    %v584 = vpop.f32.mrf.mxu0
    %585 = vdwg.mxu0
    %586 = vmatprep.subr.bf16.mxu0 0
    %587 = vmatpush1.bf16.msra.mxu0 0
    %588 = vmatprep.subr.bf16.mxu0 0
    %589 = vmatpush1.bf16.msra.mxu0 0
    %590 = vmatprep.subr.bf16.mxu0 0
    %591 = vmatpush1.bf16.msra.mxu0 0
    %592 = vmatprep.subr.bf16.mxu0 0
    %593 = vmatpush1.bf16.msra.mxu0 0
    %594 = vmatprep.subr.bf16.mxu0 0
    %595 = vmatpush1.bf16.msra.mxu0 0
    %596 = vmatprep.subr.bf16.mxu0 0
    %597 = vmatpush1.bf16.msra.mxu0 0
    %598 = vmatprep.subr.bf16.mxu0 0
    %599 = vmatpush1.bf16.msra.mxu0 0
    %600 = vmatprep.subr.bf16.mxu0 0
    %601 = vmatpush1.bf16.msra.mxu0 %v537
    %602 = vmatprep.subr.bf16.mxu0 0
    %603 = vmatpush2.bf16.msra.mxu0 0
    %604 = vmatprep.subr.bf16.mxu0 0
    %605 = vmatpush2.bf16.msra.mxu0 0
    %606 = vmatprep.subr.bf16.mxu0 0
    %607 = vmatpush2.bf16.msra.mxu0 0
    %608 = vmatprep.subr.bf16.mxu0 0
    %609 = vmatpush2.bf16.msra.mxu0 0
    %610 = vmatprep.subr.bf16.mxu0 0
    %611 = vmatpush2.bf16.msra.mxu0 0
    %612 = vmatprep.subr.bf16.mxu0 0
    %613 = vmatpush2.bf16.msra.mxu0 0
    %614 = vmatprep.subr.bf16.mxu0 0
    %615 = vmatpush2.bf16.msra.mxu0 0
    %616 = vmatprep.subr.bf16.mxu0 0
    %617 = vmatpush2.bf16.msra.mxu0 0
    %618 = vmatprep.mubr.bf16.mxu0 0
    %619 = vmatmul.mubr.bf16.gmra.mxu0 %v543
    %v620 = vpop.f32.mrf.mxu0
    %v621 = vadd.f32 0.0, %v620
    %v622 = vpop.f32.mrf.mxu0
    %v623 = vpop.f32.mrf.mxu0
    %v624 = vpop.f32.mrf.mxu0
    %625 = vdwg.mxu0
    %v626 = vrot.slane %v580, 4
    %v627 = vadd.f32 %v580, %v626
    %v628 = vrot.slane %v627, 2
    %v629 = vadd.f32 %v627, %v628
    %v630 = vrot.slane %v629, 1
    %v631 = vadd.f32 %v629, %v630
    %v632 = vrot.slane %v582, 4
    %v633 = vadd.f32 %v582, %v632
    %v634 = vrot.slane %v633, 2
    %v635 = vadd.f32 %v633, %v634
    %v636 = vrot.slane %v635, 1
    %v637 = vadd.f32 %v635, %v636
    %vm638 = vcmask 359424
    %v639 = vsel %vm638, %v621, 0.0
    %v640 = vrot.slane %v639, 4
    %v641 = vadd.f32 %v639, %v640
    %v642 = vrot.slane %v641, 2
    %v643 = vadd.f32 %v641, %v642
    %v644 = vrot.slane %v643, 1
    %v645 = vadd.f32 %v643, %v644
    %v646 = vmul.f32 %v580, %v580
    %v647 = vmul.f32 %v582, %v582
    %v648 = vmul.f32 %v621, %v621
    %v649 = vrot.slane %v646, 4
    %v650 = vadd.f32 %v646, %v649
    %v651 = vrot.slane %v650, 2
    %v652 = vadd.f32 %v650, %v651
    %v653 = vrot.slane %v652, 1
    %v654 = vadd.f32 %v652, %v653
    %v655 = vrot.slane %v647, 4
    %v656 = vadd.f32 %v647, %v655
    %v657 = vrot.slane %v656, 2
    %v658 = vadd.f32 %v656, %v657
    %v659 = vrot.slane %v658, 1
    %v660 = vadd.f32 %v658, %v659
    %v661 = vsel %vm638, %v648, 0.0
    %v662 = vrot.slane %v661, 4
    %v663 = vadd.f32 %v661, %v662
    %v664 = vrot.slane %v663, 2
    %v665 = vadd.f32 %v663, %v664
    %v666 = vrot.slane %v665, 1
    %v667 = vadd.f32 %v665, %v666
    %v668 = vmul.f32 %v631, 0.125
    %v669 = vmul.f32 %v637, 0.125
    %v670 = vmul.f32 %v645, 0.125
    %v671 = vmul.f32 %v654, 0.125
    %v672 = vmul.f32 %v660, 0.125
    %v673 = vmul.f32 %v667, 0.125
    %v674 = vmul.f32 %v668, %v668
    %v675 = vmul.f32 %v669, %v669
    %v676 = vmul.f32 %v670, %v670
    %v677 = vsub.f32 %v671, %v674
    %v678 = vsub.f32 %v672, %v675
    %v679 = vsub.f32 %v673, %v676
    %v680 = vmax.f32 %v677, 0.0
    %v681 = vmax.f32 %v678, 0.0
    %v682 = vmax.f32 %v679, 0.0
    %v683 = vsub.f32 %v580, %v668
    %v684 = vsub.f32 %v582, %v669
    %v685 = vsub.f32 %v621, %v670
    %v686 = vadd.f32 %v680, 1e-05
    %v687 = vadd.f32 %v681, 1e-05
    %v688 = vadd.f32 %v682, 1e-05
    %v689 = vrsqrt.pop %v686
    %v690 = vrsqrt.pop %v687
    %v691 = vrsqrt.pop %v688
    %v692 = vmul.f32 %v683, %v689
    %v693 = vmul.f32 %v684, %v690
    %v694 = vmul.f32 %v685, %v691
    %v696 = vlaneseq
    %v697 = vshrl.u32 %v696, 7
    %v698 = vsub.s32 0, %v697
    %v699 = vrot.slane %v51, %v698
    %v700 = vlaneseq
    %v701 = vshrl.u32 %v700, 7
    %v702 = vsub.s32 1, %v701
    %v703 = vrot.slane %v51, %v702
    %v704 = vlaneseq
    %v705 = vshrl.u32 %v704, 7
    %v706 = vsub.s32 2, %v705
    %v707 = vrot.slane %v51, %v706
    %v711 = vmul.f32 %v692, %v699
    %v712 = vmul.f32 %v693, %v703
    %v713 = vmul.f32 %v694, %v707
    %v715 = vlaneseq
    %v716 = vshrl.u32 %v715, 7
    %v717 = vsub.s32 0, %v716
    %v718 = vrot.slane %v53, %v717
    %v719 = vlaneseq
    %v720 = vshrl.u32 %v719, 7
    %v721 = vsub.s32 1, %v720
    %v722 = vrot.slane %v53, %v721
    %v723 = vlaneseq
    %v724 = vshrl.u32 %v723, 7
    %v725 = vsub.s32 2, %v724
    %v726 = vrot.slane %v53, %v725
    %v730 = vadd.f32 %v711, %v718
    %v731 = vadd.f32 %v712, %v722
    %v732 = vadd.f32 %v713, %v726
    %v733 = vrot.slane %v473, 4
    %v734 = vadd.f32 %v473, %v733
    %v735 = vrot.slane %v734, 2
    %v736 = vadd.f32 %v734, %v735
    %v737 = vrot.slane %v736, 1
    %v738 = vadd.f32 %v736, %v737
    %v739 = vrot.slane %v475, 4
    %v740 = vadd.f32 %v475, %v739
    %v741 = vrot.slane %v740, 2
    %v742 = vadd.f32 %v740, %v741
    %v743 = vrot.slane %v742, 1
    %v744 = vadd.f32 %v742, %v743
    %v745 = vsel %vm638, %v514, 0.0
    %v746 = vrot.slane %v745, 4
    %v747 = vadd.f32 %v745, %v746
    %v748 = vrot.slane %v747, 2
    %v749 = vadd.f32 %v747, %v748
    %v750 = vrot.slane %v749, 1
    %v751 = vadd.f32 %v749, %v750
    %v752 = vmul.f32 %v473, %v473
    %v753 = vmul.f32 %v475, %v475
    %v754 = vmul.f32 %v514, %v514
    %v755 = vrot.slane %v752, 4
    %v756 = vadd.f32 %v752, %v755
    %v757 = vrot.slane %v756, 2
    %v758 = vadd.f32 %v756, %v757
    %v759 = vrot.slane %v758, 1
    %v760 = vadd.f32 %v758, %v759
    %v761 = vrot.slane %v753, 4
    %v762 = vadd.f32 %v753, %v761
    %v763 = vrot.slane %v762, 2
    %v764 = vadd.f32 %v762, %v763
    %v765 = vrot.slane %v764, 1
    %v766 = vadd.f32 %v764, %v765
    %v767 = vsel %vm638, %v754, 0.0
    %v768 = vrot.slane %v767, 4
    %v769 = vadd.f32 %v767, %v768
    %v770 = vrot.slane %v769, 2
    %v771 = vadd.f32 %v769, %v770
    %v772 = vrot.slane %v771, 1
    %v773 = vadd.f32 %v771, %v772
    %v774 = vmul.f32 %v738, 0.125
    %v775 = vmul.f32 %v744, 0.125
    %v776 = vmul.f32 %v751, 0.125
    %v777 = vmul.f32 %v760, 0.125
    %v778 = vmul.f32 %v766, 0.125
    %v779 = vmul.f32 %v773, 0.125
    %v780 = vmul.f32 %v774, %v774
    %v781 = vmul.f32 %v775, %v775
    %v782 = vmul.f32 %v776, %v776
    %v783 = vsub.f32 %v777, %v780
    %v784 = vsub.f32 %v778, %v781
    %v785 = vsub.f32 %v779, %v782
    %v786 = vmax.f32 %v783, 0.0
    %v787 = vmax.f32 %v784, 0.0
    %v788 = vmax.f32 %v785, 0.0
    %v789 = vsub.f32 %v473, %v774
    %v790 = vsub.f32 %v475, %v775
    %v791 = vsub.f32 %v514, %v776
    %v792 = vadd.f32 %v786, 1e-05
    %v793 = vadd.f32 %v787, 1e-05
    %v794 = vadd.f32 %v788, 1e-05
    %v795 = vrsqrt.pop %v792
    %v796 = vrsqrt.pop %v793
    %v797 = vrsqrt.pop %v794
    %v798 = vmul.f32 %v789, %v795
    %v799 = vmul.f32 %v790, %v796
    %v800 = vmul.f32 %v791, %v797
    %v802 = vlaneseq
    %v803 = vshrl.u32 %v802, 7
    %v804 = vsub.s32 0, %v803
    %v805 = vrot.slane %v55, %v804
    %v806 = vlaneseq
    %v807 = vshrl.u32 %v806, 7
    %v808 = vsub.s32 1, %v807
    %v809 = vrot.slane %v55, %v808
    %v810 = vlaneseq
    %v811 = vshrl.u32 %v810, 7
    %v812 = vsub.s32 2, %v811
    %v813 = vrot.slane %v55, %v812
    %v817 = vmul.f32 %v798, %v805
    %v818 = vmul.f32 %v799, %v809
    %v819 = vmul.f32 %v800, %v813
    %v821 = vlaneseq
    %v822 = vshrl.u32 %v821, 7
    %v823 = vsub.s32 0, %v822
    %v824 = vrot.slane %v57, %v823
    %v825 = vlaneseq
    %v826 = vshrl.u32 %v825, 7
    %v827 = vsub.s32 1, %v826
    %v828 = vrot.slane %v57, %v827
    %v829 = vlaneseq
    %v830 = vshrl.u32 %v829, 7
    %v831 = vsub.s32 2, %v830
    %v832 = vrot.slane %v57, %v831
    %v836 = vadd.f32 %v817, %v824
    %v837 = vadd.f32 %v818, %v828
    %v838 = vadd.f32 %v819, %v832
    %v839 = vpack.c.bf16 %v730, %v730
    %v840 = vpack.c.bf16 %v731, %v731
    %v841 = vpack.c.bf16 %v732, %v732
    %v842 = vld [vmem:[%s4] sm:$0xff]
    %v843 = vld [vmem:[%s4 + $0x8] sm:$0xf]
    %v844 = vld [vmem:[%s4 + $0xc] sm:$0xff]
    %v845 = vld [vmem:[%s4 + $0x14] sm:$0xf]
    %v846 = vld [vmem:[%s4 + $0x18] sm:$0xff]
    %v847 = vld [vmem:[%s4 + $0x20] sm:$0xf]
    %v848 = vld [vmem:[%s4 + $0x24] sm:$0xff]
    %v849 = vld [vmem:[%s4 + $0x2c] sm:$0xf]
    %v850 = vld [vmem:[%s4 + $0x30] sm:$0xff]
    %v851 = vld [vmem:[%s4 + $0x38] sm:$0xf]
    %v852 = vld [vmem:[%s4 + $0x3c] sm:$0xff]
    %v853 = vld [vmem:[%s4 + $0x44] sm:$0xf]
    %v854 = vld [vmem:[%s4 + $0x48] sm:$0xff]
    %v855 = vld [vmem:[%s4 + $0x50] sm:$0xf]
    %v856 = vld [vmem:[%s4 + $0x54] sm:$0xff]
    %v857 = vld [vmem:[%s4 + $0x5c] sm:$0xf]
    %v858 = vld [vmem:[%s4 + $0x60] sm:$0xff]
    %v859 = vld [vmem:[%s4 + $0x68] sm:$0xf]
    %v860 = vld [vmem:[%s4 + $0x6c] sm:$0xff]
    %v861 = vld [vmem:[%s4 + $0x74] sm:$0xf]
    %v862 = vld [vmem:[%s4 + $0x78] sm:$0xff]
    %v863 = vld [vmem:[%s4 + $0x80] sm:$0xf]
    %v864 = vld [vmem:[%s4 + $0x84] sm:$0xff]
    %v865 = vld [vmem:[%s4 + $0x8c] sm:$0xf]
    %v866 = vld [vmem:[%s4 + $0x90] sm:$0xff]
    %v867 = vld [vmem:[%s4 + $0x98] sm:$0xf]
    %v868 = vld [vmem:[%s4 + $0x9c] sm:$0xff]
    %v869 = vld [vmem:[%s4 + $0xa4] sm:$0xf]
    %v870 = vld [vmem:[%s4 + $0xa8] sm:$0xff]
    %v871 = vld [vmem:[%s4 + $0xb0] sm:$0xf]
    %v872 = vld [vmem:[%s4 + $0xb4] sm:$0xff]
    %v873 = vld [vmem:[%s4 + $0xbc] sm:$0xf]
    %v874 = vld [vmem:[%s4 + $0xc0] sm:$0xff]
    %v875 = vld [vmem:[%s4 + $0xc8] sm:$0xf]
    %v876 = vld [vmem:[%s4 + $0xcc] sm:$0xff]
    %v877 = vld [vmem:[%s4 + $0xd4] sm:$0xf]
    %v878 = vld [vmem:[%s4 + $0xd8] sm:$0xff]
    %v879 = vld [vmem:[%s4 + $0xe0] sm:$0xf]
    %v880 = vld [vmem:[%s4 + $0xe4] sm:$0xff]
    %v881 = vld [vmem:[%s4 + $0xec] sm:$0xf]
    %v882 = vld [vmem:[%s4 + $0xf0] sm:$0xff]
    %v883 = vld [vmem:[%s4 + $0xf8] sm:$0xf]
    %v884 = vld [vmem:[%s4 + $0xfc] sm:$0xff]
    %v885 = vld [vmem:[%s4 + $0x104] sm:$0xf]
    %v886 = vld [vmem:[%s4 + $0x108] sm:$0xff]
    %v887 = vld [vmem:[%s4 + $0x110] sm:$0xf]
    %v888 = vld [vmem:[%s4 + $0x114] sm:$0xff]
    %v889 = vld [vmem:[%s4 + $0x11c] sm:$0xf]
    %v890 = vld [vmem:[%s4 + $0x120] sm:$0xff]
    %v891 = vld [vmem:[%s4 + $0x128] sm:$0xf]
    %v892 = vld [vmem:[%s4 + $0x12c] sm:$0xff]
    %v893 = vld [vmem:[%s4 + $0x134] sm:$0xf]
    %v894 = vld [vmem:[%s4 + $0x138] sm:$0xff]
    %v895 = vld [vmem:[%s4 + $0x140] sm:$0xf]
    %v896 = vld [vmem:[%s4 + $0x144] sm:$0xff]
    %v897 = vld [vmem:[%s4 + $0x14c] sm:$0xf]
    %v898 = vld [vmem:[%s4 + $0x150] sm:$0xff]
    %v899 = vld [vmem:[%s4 + $0x158] sm:$0xf]
    %v900 = vld [vmem:[%s4 + $0x15c] sm:$0xff]
    %v901 = vld [vmem:[%s4 + $0x164] sm:$0xf]
    %v902 = vld [vmem:[%s4 + $0x168] sm:$0xff]
    %v903 = vld [vmem:[%s4 + $0x170] sm:$0xf]
    %v904 = vld [vmem:[%s4 + $0x174] sm:$0xff]
    %v905 = vld [vmem:[%s4 + $0x17c] sm:$0xf]
    %v906 = vld [vmem:[%s4 + $0x180] sm:$0xff]
    %v907 = vld [vmem:[%s4 + $0x188] sm:$0xf]
    %v908 = vld [vmem:[%s4 + $0x18c] sm:$0xff]
    %v909 = vld [vmem:[%s4 + $0x194] sm:$0xf]
    %v910 = vld [vmem:[%s4 + $0x198] sm:$0xff]
    %v911 = vld [vmem:[%s4 + $0x1a0] sm:$0xf]
    %v912 = vld [vmem:[%s4 + $0x1a4] sm:$0xff]
    %v913 = vld [vmem:[%s4 + $0x1ac] sm:$0xf]
    %v914 = vld [vmem:[%s4 + $0x1b0] sm:$0xff]
    %v915 = vld [vmem:[%s4 + $0x1b8] sm:$0xf]
    %v916 = vld [vmem:[%s4 + $0x1bc] sm:$0x33]
    %v917 = vld [vmem:[%s4 + $0x1c4] sm:$0x3]
    %v918 = vpack.c.bf16 %v836, %v836
    %v919 = vpack.c.bf16 %v837, %v837
    %v920 = vpack.c.bf16 %v838, %v838
    %v921 = vld [vmem:[#allocation2] sm:$0xff]
    %v922 = vld [vmem:[#allocation2 + $0x8] sm:$0xf]
    %v923 = vld [vmem:[#allocation2 + $0xc] sm:$0xff]
    %v924 = vld [vmem:[#allocation2 + $0x14] sm:$0xf]
    %v925 = vld [vmem:[#allocation2 + $0x18] sm:$0xff]
    %v926 = vld [vmem:[#allocation2 + $0x20] sm:$0xf]
    %v927 = vld [vmem:[#allocation2 + $0x24] sm:$0xff]
    %v928 = vld [vmem:[#allocation2 + $0x2c] sm:$0xf]
    %v929 = vld [vmem:[#allocation2 + $0x30] sm:$0xff]
    %v930 = vld [vmem:[#allocation2 + $0x38] sm:$0xf]
    %v931 = vld [vmem:[#allocation2 + $0x3c] sm:$0xff]
    %v932 = vld [vmem:[#allocation2 + $0x44] sm:$0xf]
    %v933 = vld [vmem:[#allocation2 + $0x48] sm:$0xff]
    %v934 = vld [vmem:[#allocation2 + $0x50] sm:$0xf]
    %v935 = vld [vmem:[#allocation2 + $0x54] sm:$0xff]
    %v936 = vld [vmem:[#allocation2 + $0x5c] sm:$0xf]
    %v937 = vld [vmem:[#allocation2 + $0x60] sm:$0xff]
    %v938 = vld [vmem:[#allocation2 + $0x68] sm:$0xf]
    %v939 = vld [vmem:[#allocation2 + $0x6c] sm:$0xff]
    %v940 = vld [vmem:[#allocation2 + $0x74] sm:$0xf]
    %v941 = vld [vmem:[#allocation2 + $0x78] sm:$0xff]
    %v942 = vld [vmem:[#allocation2 + $0x80] sm:$0xf]
    %v943 = vld [vmem:[#allocation2 + $0x84] sm:$0xff]
    %v944 = vld [vmem:[#allocation2 + $0x8c] sm:$0xf]
    %v945 = vld [vmem:[#allocation2 + $0x90] sm:$0xff]
    %v946 = vld [vmem:[#allocation2 + $0x98] sm:$0xf]
    %v947 = vld [vmem:[#allocation2 + $0x9c] sm:$0xff]
    %v948 = vld [vmem:[#allocation2 + $0xa4] sm:$0xf]
    %v949 = vld [vmem:[#allocation2 + $0xa8] sm:$0xff]
    %v950 = vld [vmem:[#allocation2 + $0xb0] sm:$0xf]
    %v951 = vld [vmem:[#allocation2 + $0xb4] sm:$0xff]
    %v952 = vld [vmem:[#allocation2 + $0xbc] sm:$0xf]
    %v953 = vld [vmem:[#allocation2 + $0xc0] sm:$0xff]
    %v954 = vld [vmem:[#allocation2 + $0xc8] sm:$0xf]
    %v955 = vld [vmem:[#allocation2 + $0xcc] sm:$0xff]
    %v956 = vld [vmem:[#allocation2 + $0xd4] sm:$0xf]
    %v957 = vld [vmem:[#allocation2 + $0xd8] sm:$0xff]
    %v958 = vld [vmem:[#allocation2 + $0xe0] sm:$0xf]
    %v959 = vld [vmem:[#allocation2 + $0xe4] sm:$0xff]
    %v960 = vld [vmem:[#allocation2 + $0xec] sm:$0xf]
    %v961 = vld [vmem:[#allocation2 + $0xf0] sm:$0xff]
    %v962 = vld [vmem:[#allocation2 + $0xf8] sm:$0xf]
    %v963 = vld [vmem:[#allocation2 + $0xfc] sm:$0xff]
    %v964 = vld [vmem:[#allocation2 + $0x104] sm:$0xf]
    %v965 = vld [vmem:[#allocation2 + $0x108] sm:$0xff]
    %v966 = vld [vmem:[#allocation2 + $0x110] sm:$0xf]
    %v967 = vld [vmem:[#allocation2 + $0x114] sm:$0xff]
    %v968 = vld [vmem:[#allocation2 + $0x11c] sm:$0xf]
    %v969 = vld [vmem:[#allocation2 + $0x120] sm:$0xff]
    %v970 = vld [vmem:[#allocation2 + $0x128] sm:$0xf]
    %v971 = vld [vmem:[#allocation2 + $0x12c] sm:$0xff]
    %v972 = vld [vmem:[#allocation2 + $0x134] sm:$0xf]
    %v973 = vld [vmem:[#allocation2 + $0x138] sm:$0xff]
    %v974 = vld [vmem:[#allocation2 + $0x140] sm:$0xf]
    %v975 = vld [vmem:[#allocation2 + $0x144] sm:$0xff]
    %v976 = vld [vmem:[#allocation2 + $0x14c] sm:$0xf]
    %v977 = vld [vmem:[#allocation2 + $0x150] sm:$0xff]
    %v978 = vld [vmem:[#allocation2 + $0x158] sm:$0xf]
    %v979 = vld [vmem:[#allocation2 + $0x15c] sm:$0xff]
    %v980 = vld [vmem:[#allocation2 + $0x164] sm:$0xf]
    %v981 = vld [vmem:[#allocation2 + $0x168] sm:$0xff]
    %v982 = vld [vmem:[#allocation2 + $0x170] sm:$0xf]
    %v983 = vld [vmem:[#allocation2 + $0x174] sm:$0xff]
    %v984 = vld [vmem:[#allocation2 + $0x17c] sm:$0xf]
    %v985 = vld [vmem:[#allocation2 + $0x180] sm:$0xff]
    %v986 = vld [vmem:[#allocation2 + $0x188] sm:$0xf]
    %v987 = vld [vmem:[#allocation2 + $0x18c] sm:$0xff]
    %v988 = vld [vmem:[#allocation2 + $0x194] sm:$0xf]
    %v989 = vld [vmem:[#allocation2 + $0x198] sm:$0xff]
    %v990 = vld [vmem:[#allocation2 + $0x1a0] sm:$0xf]
    %v991 = vld [vmem:[#allocation2 + $0x1a4] sm:$0xff]
    %v992 = vld [vmem:[#allocation2 + $0x1ac] sm:$0xf]
    %v993 = vld [vmem:[#allocation2 + $0x1b0] sm:$0xff]
    %v994 = vld [vmem:[#allocation2 + $0x1b8] sm:$0xf]
    %v995 = vld [vmem:[#allocation2 + $0x1bc] sm:$0x33]
    %v996 = vld [vmem:[#allocation2 + $0x1c4] sm:$0x3]
    %v1073 = vunpack.c.l.b16 %v921
    %v1074 = vunpack.c.h.b16 %v921
    %v1075 = vunpack.c.l.b16 %v922
    %v1076 = vunpack.c.l.b16 %v923
    %v1077 = vunpack.c.h.b16 %v923
    %v1078 = vunpack.c.l.b16 %v924
    %v1079 = vunpack.c.l.b16 %v925
    %v1080 = vunpack.c.h.b16 %v925
    %v1081 = vunpack.c.l.b16 %v926
    %v1082 = vunpack.c.l.b16 %v927
    %v1083 = vunpack.c.h.b16 %v927
    %v1084 = vunpack.c.l.b16 %v928
    %v1085 = vunpack.c.l.b16 %v929
    %v1086 = vunpack.c.h.b16 %v929
    %v1087 = vunpack.c.l.b16 %v930
    %v1088 = vunpack.c.l.b16 %v931
    %v1089 = vunpack.c.h.b16 %v931
    %v1090 = vunpack.c.l.b16 %v932
    %v1091 = vunpack.c.l.b16 %v933
    %v1092 = vunpack.c.h.b16 %v933
    %v1093 = vunpack.c.l.b16 %v934
    %v1094 = vunpack.c.l.b16 %v935
    %v1095 = vunpack.c.h.b16 %v935
    %v1096 = vunpack.c.l.b16 %v936
    %v1097 = vunpack.c.l.b16 %v937
    %v1098 = vunpack.c.h.b16 %v937
    %v1099 = vunpack.c.l.b16 %v938
    %v1100 = vunpack.c.l.b16 %v939
    %v1101 = vunpack.c.h.b16 %v939
    %v1102 = vunpack.c.l.b16 %v940
    %v1103 = vunpack.c.l.b16 %v941
    %v1104 = vunpack.c.h.b16 %v941
    %v1105 = vunpack.c.l.b16 %v942
    %v1106 = vunpack.c.l.b16 %v943
    %v1107 = vunpack.c.h.b16 %v943
    %v1108 = vunpack.c.l.b16 %v944
    %v1109 = vunpack.c.l.b16 %v945
    %v1110 = vunpack.c.h.b16 %v945
    %v1111 = vunpack.c.l.b16 %v946
    %v1112 = vunpack.c.l.b16 %v947
    %v1113 = vunpack.c.h.b16 %v947
    %v1114 = vunpack.c.l.b16 %v948
    %v1115 = vunpack.c.l.b16 %v949
    %v1116 = vunpack.c.h.b16 %v949
    %v1117 = vunpack.c.l.b16 %v950
    %v1118 = vunpack.c.l.b16 %v951
    %v1119 = vunpack.c.h.b16 %v951
    %v1120 = vunpack.c.l.b16 %v952
    %v1121 = vunpack.c.l.b16 %v953
    %v1122 = vunpack.c.h.b16 %v953
    %v1123 = vunpack.c.l.b16 %v954
    %v1124 = vunpack.c.l.b16 %v955
    %v1125 = vunpack.c.h.b16 %v955
    %v1126 = vunpack.c.l.b16 %v956
    %v1127 = vunpack.c.l.b16 %v957
    %v1128 = vunpack.c.h.b16 %v957
    %v1129 = vunpack.c.l.b16 %v958
    %v1130 = vunpack.c.l.b16 %v959
    %v1131 = vunpack.c.h.b16 %v959
    %v1132 = vunpack.c.l.b16 %v960
    %v1133 = vunpack.c.l.b16 %v961
    %v1134 = vunpack.c.h.b16 %v961
    %v1135 = vunpack.c.l.b16 %v962
    %v1136 = vunpack.c.l.b16 %v963
    %v1137 = vunpack.c.h.b16 %v963
    %v1138 = vunpack.c.l.b16 %v964
    %v1139 = vunpack.c.l.b16 %v965
    %v1140 = vunpack.c.h.b16 %v965
    %v1141 = vunpack.c.l.b16 %v966
    %v1142 = vunpack.c.l.b16 %v967
    %v1143 = vunpack.c.h.b16 %v967
    %v1144 = vunpack.c.l.b16 %v968
    %v1145 = vunpack.c.l.b16 %v969
    %v1146 = vunpack.c.h.b16 %v969
    %v1147 = vunpack.c.l.b16 %v970
    %v1148 = vunpack.c.l.b16 %v971
    %v1149 = vunpack.c.h.b16 %v971
    %v1150 = vunpack.c.l.b16 %v972
    %v1151 = vunpack.c.l.b16 %v973
    %v1152 = vunpack.c.h.b16 %v973
    %v1153 = vunpack.c.l.b16 %v974
    %v1154 = vunpack.c.l.b16 %v975
    %v1155 = vunpack.c.h.b16 %v975
    %v1156 = vunpack.c.l.b16 %v976
    %v1157 = vunpack.c.l.b16 %v977
    %v1158 = vunpack.c.h.b16 %v977
    %v1159 = vunpack.c.l.b16 %v978
    %v1160 = vunpack.c.l.b16 %v979
    %v1161 = vunpack.c.h.b16 %v979
    %v1162 = vunpack.c.l.b16 %v980
    %v1163 = vunpack.c.l.b16 %v981
    %v1164 = vunpack.c.h.b16 %v981
    %v1165 = vunpack.c.l.b16 %v982
    %v1166 = vunpack.c.l.b16 %v983
    %v1167 = vunpack.c.h.b16 %v983
    %v1168 = vunpack.c.l.b16 %v984
    %v1169 = vunpack.c.l.b16 %v985
    %v1170 = vunpack.c.h.b16 %v985
    %v1171 = vunpack.c.l.b16 %v986
    %v1172 = vunpack.c.l.b16 %v987
    %v1173 = vunpack.c.h.b16 %v987
    %v1174 = vunpack.c.l.b16 %v988
    %v1175 = vunpack.c.l.b16 %v989
    %v1176 = vunpack.c.h.b16 %v989
    %v1177 = vunpack.c.l.b16 %v990
    %v1178 = vunpack.c.l.b16 %v991
    %v1179 = vunpack.c.h.b16 %v991
    %v1180 = vunpack.c.l.b16 %v992
    %v1181 = vunpack.c.l.b16 %v993
    %v1182 = vunpack.c.h.b16 %v993
    %v1183 = vunpack.c.l.b16 %v994
    %v1184 = vunpack.c.l.b16 %v995
    %v1185 = vunpack.c.h.b16 %v995
    %v1186 = vunpack.c.l.b16 %v996
    %v1187 = vpack.c.b16 %v1076, %v1073
    %v1188 = vpack.c.b16 %v1077, %v1074
    %v1189 = vpack.c.b16 %v1078, %v1075
    %v1190 = vpack.c.b16 %v1082, %v1079
    %v1191 = vpack.c.b16 %v1083, %v1080
    %v1192 = vpack.c.b16 %v1084, %v1081
    %v1193 = vpack.c.b16 %v1088, %v1085
    %v1194 = vpack.c.b16 %v1089, %v1086
    %v1195 = vpack.c.b16 %v1090, %v1087
    %v1196 = vpack.c.b16 %v1094, %v1091
    %v1197 = vpack.c.b16 %v1095, %v1092
    %v1198 = vpack.c.b16 %v1096, %v1093
    %v1199 = vpack.c.b16 %v1100, %v1097
    %v1200 = vpack.c.b16 %v1101, %v1098
    %v1201 = vpack.c.b16 %v1102, %v1099
    %v1202 = vpack.c.b16 %v1106, %v1103
    %v1203 = vpack.c.b16 %v1107, %v1104
    %v1204 = vpack.c.b16 %v1108, %v1105
    %v1205 = vpack.c.b16 %v1112, %v1109
    %v1206 = vpack.c.b16 %v1113, %v1110
    %v1207 = vpack.c.b16 %v1114, %v1111
    %v1208 = vpack.c.b16 %v1118, %v1115
    %v1209 = vpack.c.b16 %v1119, %v1116
    %v1210 = vpack.c.b16 %v1120, %v1117
    %v1211 = vpack.c.b16 %v1124, %v1121
    %v1212 = vpack.c.b16 %v1125, %v1122
    %v1213 = vpack.c.b16 %v1126, %v1123
    %v1214 = vpack.c.b16 %v1130, %v1127
    %v1215 = vpack.c.b16 %v1131, %v1128
    %v1216 = vpack.c.b16 %v1132, %v1129
    %v1217 = vpack.c.b16 %v1136, %v1133
    %v1218 = vpack.c.b16 %v1137, %v1134
    %v1219 = vpack.c.b16 %v1138, %v1135
    %v1220 = vpack.c.b16 %v1142, %v1139
    %v1221 = vpack.c.b16 %v1143, %v1140
    %v1222 = vpack.c.b16 %v1144, %v1141
    %v1223 = vpack.c.b16 %v1148, %v1145
    %v1224 = vpack.c.b16 %v1149, %v1146
    %v1225 = vpack.c.b16 %v1150, %v1147
    %v1226 = vpack.c.b16 %v1154, %v1151
    %v1227 = vpack.c.b16 %v1155, %v1152
    %v1228 = vpack.c.b16 %v1156, %v1153
    %v1229 = vpack.c.b16 %v1160, %v1157
    %v1230 = vpack.c.b16 %v1161, %v1158
    %v1231 = vpack.c.b16 %v1162, %v1159
    %v1232 = vpack.c.b16 %v1166, %v1163
    %v1233 = vpack.c.b16 %v1167, %v1164
    %v1234 = vpack.c.b16 %v1168, %v1165
    %v1235 = vpack.c.b16 %v1172, %v1169
    %v1236 = vpack.c.b16 %v1173, %v1170
    %v1237 = vpack.c.b16 %v1174, %v1171
    %v1238 = vpack.c.b16 %v1178, %v1175
    %v1239 = vpack.c.b16 %v1179, %v1176
    %v1240 = vpack.c.b16 %v1180, %v1177
    %v1241 = vpack.c.b16 %v1184, %v1181
    %v1242 = vpack.c.b16 %v1185, %v1182
    %v1243 = vpack.c.b16 %v1186, %v1183
    %v1299 = vsel %vm638, %v920, 0
    %vm1301 = vcmask 1045504
    %v1303 = vsel %vm1301, %v1241, 0
    %v1306 = vsel %vm1301, %v1242, 0
    %v1309 = vsel %vm1301, %v1243, 0
    %1311 = vmatprep.subr.bf16.mxu0 %v1209
    %1312 = vmatpush1.bf16.msra.mxu0 %v1208
    %1313 = vmatprep.subr.bf16.mxu0 %v1206
    %1314 = vmatpush1.bf16.msra.mxu0 %v1205
    %1315 = vmatprep.subr.bf16.mxu0 %v1203
    %1316 = vmatpush1.bf16.msra.mxu0 %v1202
    %1317 = vmatprep.subr.bf16.mxu0 %v1200
    %1318 = vmatpush1.bf16.msra.mxu0 %v1199
    %1319 = vmatprep.subr.bf16.mxu0 %v1197
    %1320 = vmatpush1.bf16.msra.mxu0 %v1196
    %1321 = vmatprep.subr.bf16.mxu0 %v1194
    %1322 = vmatpush1.bf16.msra.mxu0 %v1193
    %1323 = vmatprep.subr.bf16.mxu0 %v1191
    %1324 = vmatpush1.bf16.msra.mxu0 %v1190
    %1325 = vmatprep.subr.bf16.mxu0 %v1188
    %1326 = vmatpush1.bf16.msra.mxu0 %v1187
    %1327 = vmatprep.subr.bf16.mxu0 %v1233
    %1328 = vmatpush2.bf16.msra.mxu0 %v1232
    %1329 = vmatprep.subr.bf16.mxu0 %v1230
    %1330 = vmatpush2.bf16.msra.mxu0 %v1229
    %1331 = vmatprep.subr.bf16.mxu0 %v1227
    %1332 = vmatpush2.bf16.msra.mxu0 %v1226
    %1333 = vmatprep.subr.bf16.mxu0 %v1224
    %1334 = vmatpush2.bf16.msra.mxu0 %v1223
    %1335 = vmatprep.subr.bf16.mxu0 %v1221
    %1336 = vmatpush2.bf16.msra.mxu0 %v1220
    %1337 = vmatprep.subr.bf16.mxu0 %v1218
    %1338 = vmatpush2.bf16.msra.mxu0 %v1217
    %1339 = vmatprep.subr.bf16.mxu0 %v1215
    %1340 = vmatpush2.bf16.msra.mxu0 %v1214
    %1341 = vmatprep.subr.bf16.mxu0 %v1212
    %1342 = vmatpush2.bf16.msra.mxu0 %v1211
    %1343 = vmatprep.mubr.bf16.mxu0 %v919
    %1344 = vmatmul.mubr.bf16.gmra.mxu0 %v918
    %v1345 = vpop.f32.mrf.mxu0
    %v1346 = vadd.f32 0.0, %v1345
    %v1347 = vpop.f32.mrf.mxu0
    %v1348 = vadd.f32 0.0, %v1347
    %v1349 = vpop.f32.mrf.mxu0
    %v1350 = vpop.f32.mrf.mxu0
    %1351 = vdwg.mxu0
    %1352 = vmatprep.subr.bf16.mxu0 0
    %1353 = vmatpush1.bf16.msra.mxu0 0
    %1354 = vmatprep.subr.bf16.mxu0 0
    %1355 = vmatpush1.bf16.msra.mxu0 0
    %1356 = vmatprep.subr.bf16.mxu0 0
    %1357 = vmatpush1.bf16.msra.mxu0 0
    %1358 = vmatprep.subr.bf16.mxu0 0
    %1359 = vmatpush1.bf16.msra.mxu0 0
    %1360 = vmatprep.subr.bf16.mxu0 0
    %1361 = vmatpush1.bf16.msra.mxu0 0
    %1362 = vmatprep.subr.bf16.mxu0 %v1306
    %1363 = vmatpush1.bf16.msra.mxu0 %v1303
    %1364 = vmatprep.subr.bf16.mxu0 %v1239
    %1365 = vmatpush1.bf16.msra.mxu0 %v1238
    %1366 = vmatprep.subr.bf16.mxu0 %v1236
    %1367 = vmatpush1.bf16.msra.mxu0 %v1235
    %1368 = vmatprep.subr.bf16.mxu0 0
    %1369 = vmatpush2.bf16.msra.mxu0 0
    %1370 = vmatprep.subr.bf16.mxu0 0
    %1371 = vmatpush2.bf16.msra.mxu0 0
    %1372 = vmatprep.subr.bf16.mxu0 0
    %1373 = vmatpush2.bf16.msra.mxu0 0
    %1374 = vmatprep.subr.bf16.mxu0 0
    %1375 = vmatpush2.bf16.msra.mxu0 0
    %1376 = vmatprep.subr.bf16.mxu0 0
    %1377 = vmatpush2.bf16.msra.mxu0 0
    %1378 = vmatprep.subr.bf16.mxu0 0
    %1379 = vmatpush2.bf16.msra.mxu0 0
    %1380 = vmatprep.subr.bf16.mxu0 0
    %1381 = vmatpush2.bf16.msra.mxu0 0
    %1382 = vmatprep.subr.bf16.mxu0 0
    %1383 = vmatpush2.bf16.msra.mxu0 0
    %1384 = vmatprep.mubr.bf16.mxu0 0
    %1385 = vmatmul.mubr.bf16.gmra.mxu0 %v1299
    %v1386 = vpop.f32.mrf.mxu0
    %v1387 = vadd.f32 %v1346, %v1386
    %v1388 = vpop.f32.mrf.mxu0
    %v1389 = vadd.f32 %v1348, %v1388
    %v1390 = vpop.f32.mrf.mxu0
    %v1391 = vpop.f32.mrf.mxu0
    %1392 = vdwg.mxu0
    %1393 = vmatprep.subr.bf16.mxu0 0
    %1394 = vmatpush1.bf16.msra.mxu0 %v1210
    %1395 = vmatprep.subr.bf16.mxu0 0
    %1396 = vmatpush1.bf16.msra.mxu0 %v1207
    %1397 = vmatprep.subr.bf16.mxu0 0
    %1398 = vmatpush1.bf16.msra.mxu0 %v1204
    %1399 = vmatprep.subr.bf16.mxu0 0
    %1400 = vmatpush1.bf16.msra.mxu0 %v1201
    %1401 = vmatprep.subr.bf16.mxu0 0
    %1402 = vmatpush1.bf16.msra.mxu0 %v1198
    %1403 = vmatprep.subr.bf16.mxu0 0
    %1404 = vmatpush1.bf16.msra.mxu0 %v1195
    %1405 = vmatprep.subr.bf16.mxu0 0
    %1406 = vmatpush1.bf16.msra.mxu0 %v1192
    %1407 = vmatprep.subr.bf16.mxu0 0
    %1408 = vmatpush1.bf16.msra.mxu0 %v1189
    %1409 = vmatprep.subr.bf16.mxu0 0
    %1410 = vmatpush2.bf16.msra.mxu0 %v1234
    %1411 = vmatprep.subr.bf16.mxu0 0
    %1412 = vmatpush2.bf16.msra.mxu0 %v1231
    %1413 = vmatprep.subr.bf16.mxu0 0
    %1414 = vmatpush2.bf16.msra.mxu0 %v1228
    %1415 = vmatprep.subr.bf16.mxu0 0
    %1416 = vmatpush2.bf16.msra.mxu0 %v1225
    %1417 = vmatprep.subr.bf16.mxu0 0
    %1418 = vmatpush2.bf16.msra.mxu0 %v1222
    %1419 = vmatprep.subr.bf16.mxu0 0
    %1420 = vmatpush2.bf16.msra.mxu0 %v1219
    %1421 = vmatprep.subr.bf16.mxu0 0
    %1422 = vmatpush2.bf16.msra.mxu0 %v1216
    %1423 = vmatprep.subr.bf16.mxu0 0
    %1424 = vmatpush2.bf16.msra.mxu0 %v1213
    %1425 = vmatprep.mubr.bf16.mxu0 %v919
    %1426 = vmatmul.mubr.bf16.gmra.mxu0 %v918
    %v1427 = vpop.f32.mrf.mxu0
    %v1428 = vadd.f32 0.0, %v1427
    %v1429 = vpop.f32.mrf.mxu0
    %v1430 = vpop.f32.mrf.mxu0
    %v1431 = vpop.f32.mrf.mxu0
    %1432 = vdwg.mxu0
    %1433 = vmatprep.subr.bf16.mxu0 0
    %1434 = vmatpush1.bf16.msra.mxu0 0
    %1435 = vmatprep.subr.bf16.mxu0 0
    %1436 = vmatpush1.bf16.msra.mxu0 0
    %1437 = vmatprep.subr.bf16.mxu0 0
    %1438 = vmatpush1.bf16.msra.mxu0 0
    %1439 = vmatprep.subr.bf16.mxu0 0
    %1440 = vmatpush1.bf16.msra.mxu0 0
    %1441 = vmatprep.subr.bf16.mxu0 0
    %1442 = vmatpush1.bf16.msra.mxu0 0
    %1443 = vmatprep.subr.bf16.mxu0 0
    %1444 = vmatpush1.bf16.msra.mxu0 %v1309
    %1445 = vmatprep.subr.bf16.mxu0 0
    %1446 = vmatpush1.bf16.msra.mxu0 %v1240
    %1447 = vmatprep.subr.bf16.mxu0 0
    %1448 = vmatpush1.bf16.msra.mxu0 %v1237
    %1449 = vmatprep.subr.bf16.mxu0 0
    %1450 = vmatpush2.bf16.msra.mxu0 0
    %1451 = vmatprep.subr.bf16.mxu0 0
    %1452 = vmatpush2.bf16.msra.mxu0 0
    %1453 = vmatprep.subr.bf16.mxu0 0
    %1454 = vmatpush2.bf16.msra.mxu0 0
    %1455 = vmatprep.subr.bf16.mxu0 0
    %1456 = vmatpush2.bf16.msra.mxu0 0
    %1457 = vmatprep.subr.bf16.mxu0 0
    %1458 = vmatpush2.bf16.msra.mxu0 0
    %1459 = vmatprep.subr.bf16.mxu0 0
    %1460 = vmatpush2.bf16.msra.mxu0 0
    %1461 = vmatprep.subr.bf16.mxu0 0
    %1462 = vmatpush2.bf16.msra.mxu0 0
    %1463 = vmatprep.subr.bf16.mxu0 0
    %1464 = vmatpush2.bf16.msra.mxu0 0
    %1465 = vmatprep.mubr.bf16.mxu0 0
    %1466 = vmatmul.mubr.bf16.gmra.mxu0 %v1299
    %v1467 = vpop.f32.mrf.mxu0
    %v1468 = vadd.f32 %v1428, %v1467
    %v1469 = vpop.f32.mrf.mxu0
    %v1470 = vpop.f32.mrf.mxu0
    %v1471 = vpop.f32.mrf.mxu0
    %1472 = vdwg.mxu0
    %v1549 = vunpack.c.l.b16 %v842
    %v1550 = vunpack.c.h.b16 %v842
    %v1551 = vunpack.c.l.b16 %v843
    %v1552 = vunpack.c.l.b16 %v844
    %v1553 = vunpack.c.h.b16 %v844
    %v1554 = vunpack.c.l.b16 %v845
    %v1555 = vunpack.c.l.b16 %v846
    %v1556 = vunpack.c.h.b16 %v846
    %v1557 = vunpack.c.l.b16 %v847
    %v1558 = vunpack.c.l.b16 %v848
    %v1559 = vunpack.c.h.b16 %v848
    %v1560 = vunpack.c.l.b16 %v849
    %v1561 = vunpack.c.l.b16 %v850
    %v1562 = vunpack.c.h.b16 %v850
    %v1563 = vunpack.c.l.b16 %v851
    %v1564 = vunpack.c.l.b16 %v852
    %v1565 = vunpack.c.h.b16 %v852
    %v1566 = vunpack.c.l.b16 %v853
    %v1567 = vunpack.c.l.b16 %v854
    %v1568 = vunpack.c.h.b16 %v854
    %v1569 = vunpack.c.l.b16 %v855
    %v1570 = vunpack.c.l.b16 %v856
    %v1571 = vunpack.c.h.b16 %v856
    %v1572 = vunpack.c.l.b16 %v857
    %v1573 = vunpack.c.l.b16 %v858
    %v1574 = vunpack.c.h.b16 %v858
    %v1575 = vunpack.c.l.b16 %v859
    %v1576 = vunpack.c.l.b16 %v860
    %v1577 = vunpack.c.h.b16 %v860
    %v1578 = vunpack.c.l.b16 %v861
    %v1579 = vunpack.c.l.b16 %v862
    %v1580 = vunpack.c.h.b16 %v862
    %v1581 = vunpack.c.l.b16 %v863
    %v1582 = vunpack.c.l.b16 %v864
    %v1583 = vunpack.c.h.b16 %v864
    %v1584 = vunpack.c.l.b16 %v865
    %v1585 = vunpack.c.l.b16 %v866
    %v1586 = vunpack.c.h.b16 %v866
    %v1587 = vunpack.c.l.b16 %v867
    %v1588 = vunpack.c.l.b16 %v868
    %v1589 = vunpack.c.h.b16 %v868
    %v1590 = vunpack.c.l.b16 %v869
    %v1591 = vunpack.c.l.b16 %v870
    %v1592 = vunpack.c.h.b16 %v870
    %v1593 = vunpack.c.l.b16 %v871
    %v1594 = vunpack.c.l.b16 %v872
    %v1595 = vunpack.c.h.b16 %v872
    %v1596 = vunpack.c.l.b16 %v873
    %v1597 = vunpack.c.l.b16 %v874
    %v1598 = vunpack.c.h.b16 %v874
    %v1599 = vunpack.c.l.b16 %v875
    %v1600 = vunpack.c.l.b16 %v876
    %v1601 = vunpack.c.h.b16 %v876
    %v1602 = vunpack.c.l.b16 %v877
    %v1603 = vunpack.c.l.b16 %v878
    %v1604 = vunpack.c.h.b16 %v878
    %v1605 = vunpack.c.l.b16 %v879
    %v1606 = vunpack.c.l.b16 %v880
    %v1607 = vunpack.c.h.b16 %v880
    %v1608 = vunpack.c.l.b16 %v881
    %v1609 = vunpack.c.l.b16 %v882
    %v1610 = vunpack.c.h.b16 %v882
    %v1611 = vunpack.c.l.b16 %v883
    %v1612 = vunpack.c.l.b16 %v884
    %v1613 = vunpack.c.h.b16 %v884
    %v1614 = vunpack.c.l.b16 %v885
    %v1615 = vunpack.c.l.b16 %v886
    %v1616 = vunpack.c.h.b16 %v886
    %v1617 = vunpack.c.l.b16 %v887
    %v1618 = vunpack.c.l.b16 %v888
    %v1619 = vunpack.c.h.b16 %v888
    %v1620 = vunpack.c.l.b16 %v889
    %v1621 = vunpack.c.l.b16 %v890
    %v1622 = vunpack.c.h.b16 %v890
    %v1623 = vunpack.c.l.b16 %v891
    %v1624 = vunpack.c.l.b16 %v892
    %v1625 = vunpack.c.h.b16 %v892
    %v1626 = vunpack.c.l.b16 %v893
    %v1627 = vunpack.c.l.b16 %v894
    %v1628 = vunpack.c.h.b16 %v894
    %v1629 = vunpack.c.l.b16 %v895
    %v1630 = vunpack.c.l.b16 %v896
    %v1631 = vunpack.c.h.b16 %v896
    %v1632 = vunpack.c.l.b16 %v897
    %v1633 = vunpack.c.l.b16 %v898
    %v1634 = vunpack.c.h.b16 %v898
    %v1635 = vunpack.c.l.b16 %v899
    %v1636 = vunpack.c.l.b16 %v900
    %v1637 = vunpack.c.h.b16 %v900
    %v1638 = vunpack.c.l.b16 %v901
    %v1639 = vunpack.c.l.b16 %v902
    %v1640 = vunpack.c.h.b16 %v902
    %v1641 = vunpack.c.l.b16 %v903
    %v1642 = vunpack.c.l.b16 %v904
    %v1643 = vunpack.c.h.b16 %v904
    %v1644 = vunpack.c.l.b16 %v905
    %v1645 = vunpack.c.l.b16 %v906
    %v1646 = vunpack.c.h.b16 %v906
    %v1647 = vunpack.c.l.b16 %v907
    %v1648 = vunpack.c.l.b16 %v908
    %v1649 = vunpack.c.h.b16 %v908
    %v1650 = vunpack.c.l.b16 %v909
    %v1651 = vunpack.c.l.b16 %v910
    %v1652 = vunpack.c.h.b16 %v910
    %v1653 = vunpack.c.l.b16 %v911
    %v1654 = vunpack.c.l.b16 %v912
    %v1655 = vunpack.c.h.b16 %v912
    %v1656 = vunpack.c.l.b16 %v913
    %v1657 = vunpack.c.l.b16 %v914
    %v1658 = vunpack.c.h.b16 %v914
    %v1659 = vunpack.c.l.b16 %v915
    %v1660 = vunpack.c.l.b16 %v916
    %v1661 = vunpack.c.h.b16 %v916
    %v1662 = vunpack.c.l.b16 %v917
    %v1663 = vpack.c.b16 %v1552, %v1549
    %v1664 = vpack.c.b16 %v1553, %v1550
    %v1665 = vpack.c.b16 %v1554, %v1551
    %v1666 = vpack.c.b16 %v1558, %v1555
    %v1667 = vpack.c.b16 %v1559, %v1556
    %v1668 = vpack.c.b16 %v1560, %v1557
    %v1669 = vpack.c.b16 %v1564, %v1561
    %v1670 = vpack.c.b16 %v1565, %v1562
    %v1671 = vpack.c.b16 %v1566, %v1563
    %v1672 = vpack.c.b16 %v1570, %v1567
    %v1673 = vpack.c.b16 %v1571, %v1568
    %v1674 = vpack.c.b16 %v1572, %v1569
    %v1675 = vpack.c.b16 %v1576, %v1573
    %v1676 = vpack.c.b16 %v1577, %v1574
    %v1677 = vpack.c.b16 %v1578, %v1575
    %v1678 = vpack.c.b16 %v1582, %v1579
    %v1679 = vpack.c.b16 %v1583, %v1580
    %v1680 = vpack.c.b16 %v1584, %v1581
    %v1681 = vpack.c.b16 %v1588, %v1585
    %v1682 = vpack.c.b16 %v1589, %v1586
    %v1683 = vpack.c.b16 %v1590, %v1587
    %v1684 = vpack.c.b16 %v1594, %v1591
    %v1685 = vpack.c.b16 %v1595, %v1592
    %v1686 = vpack.c.b16 %v1596, %v1593
    %v1687 = vpack.c.b16 %v1600, %v1597
    %v1688 = vpack.c.b16 %v1601, %v1598
    %v1689 = vpack.c.b16 %v1602, %v1599
    %v1690 = vpack.c.b16 %v1606, %v1603
    %v1691 = vpack.c.b16 %v1607, %v1604
    %v1692 = vpack.c.b16 %v1608, %v1605
    %v1693 = vpack.c.b16 %v1612, %v1609
    %v1694 = vpack.c.b16 %v1613, %v1610
    %v1695 = vpack.c.b16 %v1614, %v1611
    %v1696 = vpack.c.b16 %v1618, %v1615
    %v1697 = vpack.c.b16 %v1619, %v1616
    %v1698 = vpack.c.b16 %v1620, %v1617
    %v1699 = vpack.c.b16 %v1624, %v1621
    %v1700 = vpack.c.b16 %v1625, %v1622
    %v1701 = vpack.c.b16 %v1626, %v1623
    %v1702 = vpack.c.b16 %v1630, %v1627
    %v1703 = vpack.c.b16 %v1631, %v1628
    %v1704 = vpack.c.b16 %v1632, %v1629
    %v1705 = vpack.c.b16 %v1636, %v1633
    %v1706 = vpack.c.b16 %v1637, %v1634
    %v1707 = vpack.c.b16 %v1638, %v1635
    %v1708 = vpack.c.b16 %v1642, %v1639
    %v1709 = vpack.c.b16 %v1643, %v1640
    %v1710 = vpack.c.b16 %v1644, %v1641
    %v1711 = vpack.c.b16 %v1648, %v1645
    %v1712 = vpack.c.b16 %v1649, %v1646
    %v1713 = vpack.c.b16 %v1650, %v1647
    %v1714 = vpack.c.b16 %v1654, %v1651
    %v1715 = vpack.c.b16 %v1655, %v1652
    %v1716 = vpack.c.b16 %v1656, %v1653
    %v1717 = vpack.c.b16 %v1660, %v1657
    %v1718 = vpack.c.b16 %v1661, %v1658
    %v1719 = vpack.c.b16 %v1662, %v1659
    %v1775 = vsel %vm638, %v841, 0
    %v1778 = vsel %vm1301, %v1717, 0
    %v1781 = vsel %vm1301, %v1718, 0
    %v1784 = vsel %vm1301, %v1719, 0
    %1786 = vmatprep.subr.bf16.mxu0 %v1685
    %1787 = vmatpush1.bf16.msra.mxu0 %v1684
    %1788 = vmatprep.subr.bf16.mxu0 %v1682
    %1789 = vmatpush1.bf16.msra.mxu0 %v1681
    %1790 = vmatprep.subr.bf16.mxu0 %v1679
    %1791 = vmatpush1.bf16.msra.mxu0 %v1678
    %1792 = vmatprep.subr.bf16.mxu0 %v1676
    %1793 = vmatpush1.bf16.msra.mxu0 %v1675
    %1794 = vmatprep.subr.bf16.mxu0 %v1673
    %1795 = vmatpush1.bf16.msra.mxu0 %v1672
    %1796 = vmatprep.subr.bf16.mxu0 %v1670
    %1797 = vmatpush1.bf16.msra.mxu0 %v1669
    %1798 = vmatprep.subr.bf16.mxu0 %v1667
    %1799 = vmatpush1.bf16.msra.mxu0 %v1666
    %1800 = vmatprep.subr.bf16.mxu0 %v1664
    %1801 = vmatpush1.bf16.msra.mxu0 %v1663
    %1802 = vmatprep.subr.bf16.mxu0 %v1709
    %1803 = vmatpush2.bf16.msra.mxu0 %v1708
    %1804 = vmatprep.subr.bf16.mxu0 %v1706
    %1805 = vmatpush2.bf16.msra.mxu0 %v1705
    %1806 = vmatprep.subr.bf16.mxu0 %v1703
    %1807 = vmatpush2.bf16.msra.mxu0 %v1702
    %1808 = vmatprep.subr.bf16.mxu0 %v1700
    %1809 = vmatpush2.bf16.msra.mxu0 %v1699
    %1810 = vmatprep.subr.bf16.mxu0 %v1697
    %1811 = vmatpush2.bf16.msra.mxu0 %v1696
    %1812 = vmatprep.subr.bf16.mxu0 %v1694
    %1813 = vmatpush2.bf16.msra.mxu0 %v1693
    %1814 = vmatprep.subr.bf16.mxu0 %v1691
    %1815 = vmatpush2.bf16.msra.mxu0 %v1690
    %1816 = vmatprep.subr.bf16.mxu0 %v1688
    %1817 = vmatpush2.bf16.msra.mxu0 %v1687
    %1818 = vmatprep.mubr.bf16.mxu0 %v840
    %1819 = vmatmul.mubr.bf16.gmra.mxu0 %v839
    %v1820 = vpop.f32.mrf.mxu0
    %v1821 = vadd.f32 %v1387, %v1820
    %v1822 = vpop.f32.mrf.mxu0
    %v1823 = vadd.f32 %v1389, %v1822
    %v1824 = vpop.f32.mrf.mxu0
    %v1825 = vpop.f32.mrf.mxu0
    %1826 = vdwg.mxu0
    %1827 = vmatprep.subr.bf16.mxu0 0
    %1828 = vmatpush1.bf16.msra.mxu0 0
    %1829 = vmatprep.subr.bf16.mxu0 0
    %1830 = vmatpush1.bf16.msra.mxu0 0
    %1831 = vmatprep.subr.bf16.mxu0 0
    %1832 = vmatpush1.bf16.msra.mxu0 0
    %1833 = vmatprep.subr.bf16.mxu0 0
    %1834 = vmatpush1.bf16.msra.mxu0 0
    %1835 = vmatprep.subr.bf16.mxu0 0
    %1836 = vmatpush1.bf16.msra.mxu0 0
    %1837 = vmatprep.subr.bf16.mxu0 %v1781
    %1838 = vmatpush1.bf16.msra.mxu0 %v1778
    %1839 = vmatprep.subr.bf16.mxu0 %v1715
    %1840 = vmatpush1.bf16.msra.mxu0 %v1714
    %1841 = vmatprep.subr.bf16.mxu0 %v1712
    %1842 = vmatpush1.bf16.msra.mxu0 %v1711
    %1843 = vmatprep.subr.bf16.mxu0 0
    %1844 = vmatpush2.bf16.msra.mxu0 0
    %1845 = vmatprep.subr.bf16.mxu0 0
    %1846 = vmatpush2.bf16.msra.mxu0 0
    %1847 = vmatprep.subr.bf16.mxu0 0
    %1848 = vmatpush2.bf16.msra.mxu0 0
    %1849 = vmatprep.subr.bf16.mxu0 0
    %1850 = vmatpush2.bf16.msra.mxu0 0
    %1851 = vmatprep.subr.bf16.mxu0 0
    %1852 = vmatpush2.bf16.msra.mxu0 0
    %1853 = vmatprep.subr.bf16.mxu0 0
    %1854 = vmatpush2.bf16.msra.mxu0 0
    %1855 = vmatprep.subr.bf16.mxu0 0
    %1856 = vmatpush2.bf16.msra.mxu0 0
    %1857 = vmatprep.subr.bf16.mxu0 0
    %1858 = vmatpush2.bf16.msra.mxu0 0
    %1859 = vmatprep.mubr.bf16.mxu0 0
    %1860 = vmatmul.mubr.bf16.gmra.mxu0 %v1775
    %v1861 = vpop.f32.mrf.mxu0
    %v1862 = vadd.f32 %v1821, %v1861
    %v1863 = vpop.f32.mrf.mxu0
    %v1864 = vadd.f32 %v1823, %v1863
    %v1865 = vpop.f32.mrf.mxu0
    %v1866 = vpop.f32.mrf.mxu0
    %1867 = vdwg.mxu0
    %1868 = vmatprep.subr.bf16.mxu0 0
    %1869 = vmatpush1.bf16.msra.mxu0 %v1686
    %1870 = vmatprep.subr.bf16.mxu0 0
    %1871 = vmatpush1.bf16.msra.mxu0 %v1683
    %1872 = vmatprep.subr.bf16.mxu0 0
    %1873 = vmatpush1.bf16.msra.mxu0 %v1680
    %1874 = vmatprep.subr.bf16.mxu0 0
    %1875 = vmatpush1.bf16.msra.mxu0 %v1677
    %1876 = vmatprep.subr.bf16.mxu0 0
    %1877 = vmatpush1.bf16.msra.mxu0 %v1674
    %1878 = vmatprep.subr.bf16.mxu0 0
    %1879 = vmatpush1.bf16.msra.mxu0 %v1671
    %1880 = vmatprep.subr.bf16.mxu0 0
    %1881 = vmatpush1.bf16.msra.mxu0 %v1668
    %1882 = vmatprep.subr.bf16.mxu0 0
    %1883 = vmatpush1.bf16.msra.mxu0 %v1665
    %1884 = vmatprep.subr.bf16.mxu0 0
    %1885 = vmatpush2.bf16.msra.mxu0 %v1710
    %1886 = vmatprep.subr.bf16.mxu0 0
    %1887 = vmatpush2.bf16.msra.mxu0 %v1707
    %1888 = vmatprep.subr.bf16.mxu0 0
    %1889 = vmatpush2.bf16.msra.mxu0 %v1704
    %1890 = vmatprep.subr.bf16.mxu0 0
    %1891 = vmatpush2.bf16.msra.mxu0 %v1701
    %1892 = vmatprep.subr.bf16.mxu0 0
    %1893 = vmatpush2.bf16.msra.mxu0 %v1698
    %1894 = vmatprep.subr.bf16.mxu0 0
    %1895 = vmatpush2.bf16.msra.mxu0 %v1695
    %1896 = vmatprep.subr.bf16.mxu0 0
    %1897 = vmatpush2.bf16.msra.mxu0 %v1692
    %1898 = vmatprep.subr.bf16.mxu0 0
    %1899 = vmatpush2.bf16.msra.mxu0 %v1689
    %1900 = vmatprep.mubr.bf16.mxu0 %v840
    %1901 = vmatmul.mubr.bf16.gmra.mxu0 %v839
    %v1902 = vpop.f32.mrf.mxu0
    %v1903 = vadd.f32 %v1468, %v1902
    %v1904 = vpop.f32.mrf.mxu0
    %v1905 = vpop.f32.mrf.mxu0
    %v1906 = vpop.f32.mrf.mxu0
    %1907 = vdwg.mxu0
    %1908 = vmatprep.subr.bf16.mxu0 0
    %1909 = vmatpush1.bf16.msra.mxu0 0
    %1910 = vmatprep.subr.bf16.mxu0 0
    %1911 = vmatpush1.bf16.msra.mxu0 0
    %1912 = vmatprep.subr.bf16.mxu0 0
    %1913 = vmatpush1.bf16.msra.mxu0 0
    %1914 = vmatprep.subr.bf16.mxu0 0
    %1915 = vmatpush1.bf16.msra.mxu0 0
    %1916 = vmatprep.subr.bf16.mxu0 0
    %1917 = vmatpush1.bf16.msra.mxu0 0
    %1918 = vmatprep.subr.bf16.mxu0 0
    %1919 = vmatpush1.bf16.msra.mxu0 %v1784
    %1920 = vmatprep.subr.bf16.mxu0 0
    %1921 = vmatpush1.bf16.msra.mxu0 %v1716
    %1922 = vmatprep.subr.bf16.mxu0 0
    %1923 = vmatpush1.bf16.msra.mxu0 %v1713
    %1924 = vmatprep.subr.bf16.mxu0 0
    %1925 = vmatpush2.bf16.msra.mxu0 0
    %1926 = vmatprep.subr.bf16.mxu0 0
    %1927 = vmatpush2.bf16.msra.mxu0 0
    %1928 = vmatprep.subr.bf16.mxu0 0
    %1929 = vmatpush2.bf16.msra.mxu0 0
    %1930 = vmatprep.subr.bf16.mxu0 0
    %1931 = vmatpush2.bf16.msra.mxu0 0
    %1932 = vmatprep.subr.bf16.mxu0 0
    %1933 = vmatpush2.bf16.msra.mxu0 0
    %1934 = vmatprep.subr.bf16.mxu0 0
    %1935 = vmatpush2.bf16.msra.mxu0 0
    %1936 = vmatprep.subr.bf16.mxu0 0
    %1937 = vmatpush2.bf16.msra.mxu0 0
    %1938 = vmatprep.subr.bf16.mxu0 0
    %1939 = vmatpush2.bf16.msra.mxu0 0
    %1940 = vmatprep.mubr.bf16.mxu0 0
    %1941 = vmatmul.mubr.bf16.gmra.mxu0 %v1775
    %v1942 = vpop.f32.mrf.mxu0
    %v1943 = vadd.f32 %v1903, %v1942
    %v1944 = vpop.f32.mrf.mxu0
    %v1945 = vpop.f32.mrf.mxu0
    %v1946 = vpop.f32.mrf.mxu0
    %1947 = vdwg.mxu0
    %v1949 = vlaneseq
    %v1950 = vshrl.u32 %v1949, 7
    %v1951 = vsub.s32 0, %v1950
    %v1952 = vrot.slane %v47, %v1951
    %v1953 = vlaneseq
    %v1954 = vshrl.u32 %v1953, 7
    %v1955 = vsub.s32 1, %v1954
    %v1956 = vrot.slane %v47, %v1955
    %v1957 = vlaneseq
    %v1958 = vshrl.u32 %v1957, 7
    %v1959 = vsub.s32 2, %v1958
    %v1960 = vrot.slane %v47, %v1959
    %v1964 = vadd.f32 %v1862, %v1952
    %v1965 = vadd.f32 %v1864, %v1956
    %v1966 = vadd.f32 %v1943, %v1960
    %v1967 = vtanh.pop %v1964
    %v1968 = vtanh.pop %v1965
    %v1969 = vtanh.pop %v1966
    %v1970 = vrot.slane %v1967, 4
    %v1971 = vadd.f32 %v1967, %v1970
    %v1972 = vrot.slane %v1971, 2
    %v1973 = vadd.f32 %v1971, %v1972
    %v1974 = vrot.slane %v1973, 1
    %v1975 = vadd.f32 %v1973, %v1974
    %v1976 = vrot.slane %v1968, 4
    %v1977 = vadd.f32 %v1968, %v1976
    %v1978 = vrot.slane %v1977, 2
    %v1979 = vadd.f32 %v1977, %v1978
    %v1980 = vrot.slane %v1979, 1
    %v1981 = vadd.f32 %v1979, %v1980
    %v1982 = vsel %vm638, %v1969, 0.0
    %v1983 = vrot.slane %v1982, 4
    %v1984 = vadd.f32 %v1982, %v1983
    %v1985 = vrot.slane %v1984, 2
    %v1986 = vadd.f32 %v1984, %v1985
    %v1987 = vrot.slane %v1986, 1
    %v1988 = vadd.f32 %v1986, %v1987
    %v1989 = vmul.f32 %v1967, %v1967
    %v1990 = vmul.f32 %v1968, %v1968
    %v1991 = vmul.f32 %v1969, %v1969
    %v1992 = vrot.slane %v1989, 4
    %v1993 = vadd.f32 %v1989, %v1992
    %v1994 = vrot.slane %v1993, 2
    %v1995 = vadd.f32 %v1993, %v1994
    %v1996 = vrot.slane %v1995, 1
    %v1997 = vadd.f32 %v1995, %v1996
    %v1998 = vrot.slane %v1990, 4
    %v1999 = vadd.f32 %v1990, %v1998
    %v2000 = vrot.slane %v1999, 2
    %v2001 = vadd.f32 %v1999, %v2000
    %v2002 = vrot.slane %v2001, 1
    %v2003 = vadd.f32 %v2001, %v2002
    %v2004 = vsel %vm638, %v1991, 0.0
    %v2005 = vrot.slane %v2004, 4
    %v2006 = vadd.f32 %v2004, %v2005
    %v2007 = vrot.slane %v2006, 2
    %v2008 = vadd.f32 %v2006, %v2007
    %v2009 = vrot.slane %v2008, 1
    %v2010 = vadd.f32 %v2008, %v2009
    %v2011 = vmul.f32 %v1975, 0.125
    %v2012 = vmul.f32 %v1981, 0.125
    %v2013 = vmul.f32 %v1988, 0.125
    %v2014 = vmul.f32 %v1997, 0.125
    %v2015 = vmul.f32 %v2003, 0.125
    %v2016 = vmul.f32 %v2010, 0.125
    %v2017 = vmul.f32 %v2011, %v2011
    %v2018 = vmul.f32 %v2012, %v2012
    %v2019 = vmul.f32 %v2013, %v2013
    %v2020 = vsub.f32 %v2014, %v2017
    %v2021 = vsub.f32 %v2015, %v2018
    %v2022 = vsub.f32 %v2016, %v2019
    %v2023 = vmax.f32 %v2020, 0.0
    %v2024 = vmax.f32 %v2021, 0.0
    %v2025 = vmax.f32 %v2022, 0.0
    %v2026 = vsub.f32 %v1967, %v2011
    %v2027 = vsub.f32 %v1968, %v2012
    %v2028 = vsub.f32 %v1969, %v2013
    %v2029 = vadd.f32 %v2023, 1e-05
    %v2030 = vadd.f32 %v2024, 1e-05
    %v2031 = vadd.f32 %v2025, 1e-05
    %v2032 = vrsqrt.pop %v2029
    %v2033 = vrsqrt.pop %v2030
    %v2034 = vrsqrt.pop %v2031
    %v2035 = vmul.f32 %v2026, %v2032
    %v2036 = vmul.f32 %v2027, %v2033
    %v2037 = vmul.f32 %v2028, %v2034
    %v2039 = vlaneseq
    %v2040 = vshrl.u32 %v2039, 7
    %v2041 = vsub.s32 0, %v2040
    %v2042 = vrot.slane %v59, %v2041
    %v2043 = vlaneseq
    %v2044 = vshrl.u32 %v2043, 7
    %v2045 = vsub.s32 1, %v2044
    %v2046 = vrot.slane %v59, %v2045
    %v2047 = vlaneseq
    %v2048 = vshrl.u32 %v2047, 7
    %v2049 = vsub.s32 2, %v2048
    %v2050 = vrot.slane %v59, %v2049
    %v2054 = vmul.f32 %v2035, %v2042
    %v2055 = vmul.f32 %v2036, %v2046
    %v2056 = vmul.f32 %v2037, %v2050
    %v2058 = vlaneseq
    %v2059 = vshrl.u32 %v2058, 7
    %v2060 = vsub.s32 0, %v2059
    %v2061 = vrot.slane %v61, %v2060
    %v2062 = vlaneseq
    %v2063 = vshrl.u32 %v2062, 7
    %v2064 = vsub.s32 1, %v2063
    %v2065 = vrot.slane %v61, %v2064
    %v2066 = vlaneseq
    %v2067 = vshrl.u32 %v2066, 7
    %v2068 = vsub.s32 2, %v2067
    %v2069 = vrot.slane %v61, %v2068
    %v2073 = vadd.f32 %v2054, %v2061
    %v2074 = vadd.f32 %v2055, %v2065
    %v2075 = vadd.f32 %v2056, %v2069
    %v2076 = vpack.c.bf16 %v2073, %v2073
    %v2077 = vpack.c.bf16 %v2074, %v2074
    %v2078 = vpack.c.bf16 %v2075, %v2075
    %v2079 = vld [vmem:[%s6] sm:$0xf]
    %v2080 = vld [vmem:[%s6 + $0x4] sm:$0xf]
    %v2081 = vld [vmem:[%s6 + $0x8] sm:$0xf]
    %v2082 = vld [vmem:[%s6 + $0xc] sm:$0xf]
    %v2083 = vld [vmem:[%s6 + $0x10] sm:$0xf]
    %v2084 = vld [vmem:[%s6 + $0x14] sm:$0xf]
    %v2085 = vld [vmem:[%s6 + $0x18] sm:$0xf]
    %v2086 = vld [vmem:[%s6 + $0x1c] sm:$0xf]
    %v2087 = vld [vmem:[%s6 + $0x20] sm:$0xf]
    %v2088 = vld [vmem:[%s6 + $0x24] sm:$0xf]
    %v2089 = vld [vmem:[%s6 + $0x28] sm:$0xf]
    %v2090 = vld [vmem:[%s6 + $0x2c] sm:$0xf]
    %v2091 = vld [vmem:[%s6 + $0x30] sm:$0xf]
    %v2092 = vld [vmem:[%s6 + $0x34] sm:$0xf]
    %v2093 = vld [vmem:[%s6 + $0x38] sm:$0xf]
    %v2094 = vld [vmem:[%s6 + $0x3c] sm:$0xf]
    %v2095 = vld [vmem:[%s6 + $0x40] sm:$0xf]
    %v2096 = vld [vmem:[%s6 + $0x44] sm:$0xf]
    %v2097 = vld [vmem:[%s6 + $0x48] sm:$0xf]
    %v2098 = vld [vmem:[%s6 + $0x4c] sm:$0xf]
    %v2099 = vld [vmem:[%s6 + $0x50] sm:$0xf]
    %v2100 = vld [vmem:[%s6 + $0x54] sm:$0xf]
    %v2101 = vld [vmem:[%s6 + $0x58] sm:$0xf]
    %v2102 = vld [vmem:[%s6 + $0x5c] sm:$0xf]
    %v2103 = vld [vmem:[%s6 + $0x60] sm:$0xf]
    %v2104 = vld [vmem:[%s6 + $0x64] sm:$0xf]
    %v2105 = vld [vmem:[%s6 + $0x68] sm:$0xf]
    %v2106 = vld [vmem:[%s6 + $0x6c] sm:$0xf]
    %v2107 = vld [vmem:[%s6 + $0x70] sm:$0xf]
    %v2108 = vld [vmem:[%s6 + $0x74] sm:$0xf]
    %v2109 = vld [vmem:[%s6 + $0x78] sm:$0xf]
    %v2110 = vld [vmem:[%s6 + $0x7c] sm:$0xf]
    %v2111 = vld [vmem:[%s6 + $0x80] sm:$0xf]
    %v2112 = vld [vmem:[%s6 + $0x84] sm:$0xf]
    %v2113 = vld [vmem:[%s6 + $0x88] sm:$0xf]
    %v2114 = vld [vmem:[%s6 + $0x8c] sm:$0xf]
    %v2115 = vld [vmem:[%s6 + $0x90] sm:$0xf]
    %v2116 = vld [vmem:[%s6 + $0x94] sm:$0x3]
    %v2155 = vunpack.c.l.b16 %v2079
    %v2156 = vunpack.c.l.b16 %v2080
    %v2157 = vunpack.c.l.b16 %v2081
    %v2158 = vunpack.c.l.b16 %v2082
    %v2159 = vunpack.c.l.b16 %v2083
    %v2160 = vunpack.c.l.b16 %v2084
    %v2161 = vunpack.c.l.b16 %v2085
    %v2162 = vunpack.c.l.b16 %v2086
    %v2163 = vunpack.c.l.b16 %v2087
    %v2164 = vunpack.c.l.b16 %v2088
    %v2165 = vunpack.c.l.b16 %v2089
    %v2166 = vunpack.c.l.b16 %v2090
    %v2167 = vunpack.c.l.b16 %v2091
    %v2168 = vunpack.c.l.b16 %v2092
    %v2169 = vunpack.c.l.b16 %v2093
    %v2170 = vunpack.c.l.b16 %v2094
    %v2171 = vunpack.c.l.b16 %v2095
    %v2172 = vunpack.c.l.b16 %v2096
    %v2173 = vunpack.c.l.b16 %v2097
    %v2174 = vunpack.c.l.b16 %v2098
    %v2175 = vunpack.c.l.b16 %v2099
    %v2176 = vunpack.c.l.b16 %v2100
    %v2177 = vunpack.c.l.b16 %v2101
    %v2178 = vunpack.c.l.b16 %v2102
    %v2179 = vunpack.c.l.b16 %v2103
    %v2180 = vunpack.c.l.b16 %v2104
    %v2181 = vunpack.c.l.b16 %v2105
    %v2182 = vunpack.c.l.b16 %v2106
    %v2183 = vunpack.c.l.b16 %v2107
    %v2184 = vunpack.c.l.b16 %v2108
    %v2185 = vunpack.c.l.b16 %v2109
    %v2186 = vunpack.c.l.b16 %v2110
    %v2187 = vunpack.c.l.b16 %v2111
    %v2188 = vunpack.c.l.b16 %v2112
    %v2189 = vunpack.c.l.b16 %v2113
    %v2190 = vunpack.c.l.b16 %v2114
    %v2191 = vunpack.c.l.b16 %v2115
    %v2192 = vunpack.c.l.b16 %v2116
    %v2193 = vpack.c.b16 %v2156, %v2155
    %v2194 = vpack.c.b16 %v2158, %v2157
    %v2195 = vpack.c.b16 %v2160, %v2159
    %v2196 = vpack.c.b16 %v2162, %v2161
    %v2197 = vpack.c.b16 %v2164, %v2163
    %v2198 = vpack.c.b16 %v2166, %v2165
    %v2199 = vpack.c.b16 %v2168, %v2167
    %v2200 = vpack.c.b16 %v2170, %v2169
    %v2201 = vpack.c.b16 %v2172, %v2171
    %v2202 = vpack.c.b16 %v2174, %v2173
    %v2203 = vpack.c.b16 %v2176, %v2175
    %v2204 = vpack.c.b16 %v2178, %v2177
    %v2205 = vpack.c.b16 %v2180, %v2179
    %v2206 = vpack.c.b16 %v2182, %v2181
    %v2207 = vpack.c.b16 %v2184, %v2183
    %v2208 = vpack.c.b16 %v2186, %v2185
    %v2209 = vpack.c.b16 %v2188, %v2187
    %v2210 = vpack.c.b16 %v2190, %v2189
    %v2211 = vpack.c.b16 %v2192, %v2191
    %v2231 = vsel %vm638, %v2078, 0
    %v2234 = vsel %vm1301, %v2211, 0
    %2236 = vmatprep.subr.bf16.mxu0 0
    %2237 = vmatpush1.bf16.msra.mxu0 %v2200
    %2238 = vmatprep.subr.bf16.mxu0 0
    %2239 = vmatpush1.bf16.msra.mxu0 %v2199
    %2240 = vmatprep.subr.bf16.mxu0 0
    %2241 = vmatpush1.bf16.msra.mxu0 %v2198
    %2242 = vmatprep.subr.bf16.mxu0 0
    %2243 = vmatpush1.bf16.msra.mxu0 %v2197
    %2244 = vmatprep.subr.bf16.mxu0 0
    %2245 = vmatpush1.bf16.msra.mxu0 %v2196
    %2246 = vmatprep.subr.bf16.mxu0 0
    %2247 = vmatpush1.bf16.msra.mxu0 %v2195
    %2248 = vmatprep.subr.bf16.mxu0 0
    %2249 = vmatpush1.bf16.msra.mxu0 %v2194
    %2250 = vmatprep.subr.bf16.mxu0 0
    %2251 = vmatpush1.bf16.msra.mxu0 %v2193
    %2252 = vmatprep.subr.bf16.mxu0 0
    %2253 = vmatpush2.bf16.msra.mxu0 %v2208
    %2254 = vmatprep.subr.bf16.mxu0 0
    %2255 = vmatpush2.bf16.msra.mxu0 %v2207
    %2256 = vmatprep.subr.bf16.mxu0 0
    %2257 = vmatpush2.bf16.msra.mxu0 %v2206
    %2258 = vmatprep.subr.bf16.mxu0 0
    %2259 = vmatpush2.bf16.msra.mxu0 %v2205
    %2260 = vmatprep.subr.bf16.mxu0 0
    %2261 = vmatpush2.bf16.msra.mxu0 %v2204
    %2262 = vmatprep.subr.bf16.mxu0 0
    %2263 = vmatpush2.bf16.msra.mxu0 %v2203
    %2264 = vmatprep.subr.bf16.mxu0 0
    %2265 = vmatpush2.bf16.msra.mxu0 %v2202
    %2266 = vmatprep.subr.bf16.mxu0 0
    %2267 = vmatpush2.bf16.msra.mxu0 %v2201
    %2268 = vmatprep.mubr.bf16.mxu0 %v2077
    %2269 = vmatmul.mubr.bf16.gmra.mxu0 %v2076
    %v2270 = vpop.f32.mrf.mxu0
    %v2271 = vadd.f32 %v48, %v2270
    %v2272 = vpop.f32.mrf.mxu0
    %v2273 = vpop.f32.mrf.mxu0
    %v2274 = vpop.f32.mrf.mxu0
    %2275 = vdwg.mxu0
    %2276 = vmatprep.subr.bf16.mxu0 0
    %2277 = vmatpush1.bf16.msra.mxu0 0
    %2278 = vmatprep.subr.bf16.mxu0 0
    %2279 = vmatpush1.bf16.msra.mxu0 0
    %2280 = vmatprep.subr.bf16.mxu0 0
    %2281 = vmatpush1.bf16.msra.mxu0 0
    %2282 = vmatprep.subr.bf16.mxu0 0
    %2283 = vmatpush1.bf16.msra.mxu0 0
    %2284 = vmatprep.subr.bf16.mxu0 0
    %2285 = vmatpush1.bf16.msra.mxu0 0
    %2286 = vmatprep.subr.bf16.mxu0 0
    %2287 = vmatpush1.bf16.msra.mxu0 %v2234
    %2288 = vmatprep.subr.bf16.mxu0 0
    %2289 = vmatpush1.bf16.msra.mxu0 %v2210
    %2290 = vmatprep.subr.bf16.mxu0 0
    %2291 = vmatpush1.bf16.msra.mxu0 %v2209
    %2292 = vmatprep.subr.bf16.mxu0 0
    %2293 = vmatpush2.bf16.msra.mxu0 0
    %2294 = vmatprep.subr.bf16.mxu0 0
    %2295 = vmatpush2.bf16.msra.mxu0 0
    %2296 = vmatprep.subr.bf16.mxu0 0
    %2297 = vmatpush2.bf16.msra.mxu0 0
    %2298 = vmatprep.subr.bf16.mxu0 0
    %2299 = vmatpush2.bf16.msra.mxu0 0
    %2300 = vmatprep.subr.bf16.mxu0 0
    %2301 = vmatpush2.bf16.msra.mxu0 0
    %2302 = vmatprep.subr.bf16.mxu0 0
    %2303 = vmatpush2.bf16.msra.mxu0 0
    %2304 = vmatprep.subr.bf16.mxu0 0
    %2305 = vmatpush2.bf16.msra.mxu0 0
    %2306 = vmatprep.subr.bf16.mxu0 0
    %2307 = vmatpush2.bf16.msra.mxu0 0
    %2308 = vmatprep.mubr.bf16.mxu0 0
    %2309 = vmatmul.mubr.bf16.gmra.mxu0 %v2231
    %v2310 = vpop.f32.mrf.mxu0
    %v2311 = vadd.f32 %v2271, %v2310
    %v2312 = vpop.f32.mrf.mxu0
    %v2313 = vpop.f32.mrf.mxu0
    %v2314 = vpop.f32.mrf.mxu0
    %2315 = vdwg.mxu0
    %v2316 = vmax.f32 %v2311, 0.0
    %v2317 = vrot.slane %v2316, 4
    %v2318 = vadd.f32 %v2316, %v2317
    %v2319 = vrot.slane %v2318, 2
    %v2320 = vadd.f32 %v2318, %v2319
    %v2321 = vrot.slane %v2320, 1
    %v2322 = vadd.f32 %v2320, %v2321
    %v2323 = vmul.f32 %v2316, %v2316
    %v2324 = vrot.slane %v2323, 4
    %v2325 = vadd.f32 %v2323, %v2324
    %v2326 = vrot.slane %v2325, 2
    %v2327 = vadd.f32 %v2325, %v2326
    %v2328 = vrot.slane %v2327, 1
    %v2329 = vadd.f32 %v2327, %v2328
    %v2330 = vmul.f32 %v2322, 0.125
    %v2331 = vmul.f32 %v2329, 0.125
    %v2332 = vmul.f32 %v2330, %v2330
    %v2333 = vsub.f32 %v2331, %v2332
    %v2334 = vmax.f32 %v2333, 0.0
    %v2335 = vsub.f32 %v2316, %v2330
    %v2336 = vadd.f32 %v2334, 1e-05
    %v2337 = vrsqrt.pop %v2336
    %v2338 = vmul.f32 %v2335, %v2337
    %v2339 = vmul.f32 %v2338, %v62
    %v2340 = vadd.f32 %v2339, %v63
    %v2341 = vpack.c.bf16 %v2340, %v2340
    %v2342 = vld [vmem:[%s7] sm:$0xf]
    %v2343 = vld [vmem:[%s7 + $0x4] sm:$0xf]
    %v2344 = vld [vmem:[%s7 + $0x8] sm:$0xf]
    %v2345 = vld [vmem:[%s7 + $0xc] sm:$0xf]
    %v2346 = vld [vmem:[%s7 + $0x10] sm:$0xf]
    %v2347 = vld [vmem:[%s7 + $0x14] sm:$0xf]
    %v2348 = vld [vmem:[%s7 + $0x18] sm:$0xf]
    %v2349 = vld [vmem:[%s7 + $0x1c] sm:$0xf]
    %v2350 = vld [vmem:[%s7 + $0x20] sm:$0xf]
    %v2351 = vld [vmem:[%s7 + $0x24] sm:$0xf]
    %v2352 = vld [vmem:[%s7 + $0x28] sm:$0xf]
    %v2353 = vld [vmem:[%s7 + $0x2c] sm:$0xf]
    %v2354 = vld [vmem:[%s7 + $0x30] sm:$0xf]
    %v2355 = vld [vmem:[%s7 + $0x34] sm:$0xf]
    %v2356 = vld [vmem:[%s7 + $0x38] sm:$0xf]
    %v2357 = vld [vmem:[%s7 + $0x3c] sm:$0xf]
    %v2374 = vunpack.c.l.b16 %v2342
    %v2375 = vunpack.c.l.b16 %v2343
    %v2376 = vunpack.c.l.b16 %v2344
    %v2377 = vunpack.c.l.b16 %v2345
    %v2378 = vunpack.c.l.b16 %v2346
    %v2379 = vunpack.c.l.b16 %v2347
    %v2380 = vunpack.c.l.b16 %v2348
    %v2381 = vunpack.c.l.b16 %v2349
    %v2382 = vunpack.c.l.b16 %v2350
    %v2383 = vunpack.c.l.b16 %v2351
    %v2384 = vunpack.c.l.b16 %v2352
    %v2385 = vunpack.c.l.b16 %v2353
    %v2386 = vunpack.c.l.b16 %v2354
    %v2387 = vunpack.c.l.b16 %v2355
    %v2388 = vunpack.c.l.b16 %v2356
    %v2389 = vunpack.c.l.b16 %v2357
    %v2390 = vpack.c.b16 %v2375, %v2374
    %v2391 = vpack.c.b16 %v2377, %v2376
    %v2392 = vpack.c.b16 %v2379, %v2378
    %v2393 = vpack.c.b16 %v2381, %v2380
    %v2394 = vpack.c.b16 %v2383, %v2382
    %v2395 = vpack.c.b16 %v2385, %v2384
    %v2396 = vpack.c.b16 %v2387, %v2386
    %v2397 = vpack.c.b16 %v2389, %v2388
    %2406 = vmatprep.subr.bf16.mxu0 0
    %2407 = vmatpush1.bf16.msra.mxu0 %v2397
    %2408 = vmatprep.subr.bf16.mxu0 0
    %2409 = vmatpush1.bf16.msra.mxu0 %v2396
    %2410 = vmatprep.subr.bf16.mxu0 0
    %2411 = vmatpush1.bf16.msra.mxu0 %v2395
    %2412 = vmatprep.subr.bf16.mxu0 0
    %2413 = vmatpush1.bf16.msra.mxu0 %v2394
    %2414 = vmatprep.subr.bf16.mxu0 0
    %2415 = vmatpush1.bf16.msra.mxu0 %v2393
    %2416 = vmatprep.subr.bf16.mxu0 0
    %2417 = vmatpush1.bf16.msra.mxu0 %v2392
    %2418 = vmatprep.subr.bf16.mxu0 0
    %2419 = vmatpush1.bf16.msra.mxu0 %v2391
    %2420 = vmatprep.subr.bf16.mxu0 0
    %2421 = vmatpush1.bf16.msra.mxu0 %v2390
    %2422 = vmatprep.subr.bf16.mxu0 0
    %2423 = vmatpush2.bf16.msra.mxu0 0
    %2424 = vmatprep.subr.bf16.mxu0 0
    %2425 = vmatpush2.bf16.msra.mxu0 0
    %2426 = vmatprep.subr.bf16.mxu0 0
    %2427 = vmatpush2.bf16.msra.mxu0 0
    %2428 = vmatprep.subr.bf16.mxu0 0
    %2429 = vmatpush2.bf16.msra.mxu0 0
    %2430 = vmatprep.subr.bf16.mxu0 0
    %2431 = vmatpush2.bf16.msra.mxu0 0
    %2432 = vmatprep.subr.bf16.mxu0 0
    %2433 = vmatpush2.bf16.msra.mxu0 0
    %2434 = vmatprep.subr.bf16.mxu0 0
    %2435 = vmatpush2.bf16.msra.mxu0 0
    %2436 = vmatprep.subr.bf16.mxu0 0
    %2437 = vmatpush2.bf16.msra.mxu0 0
    %2438 = vmatprep.mubr.bf16.mxu0 0
    %2439 = vmatmul.mubr.bf16.gmra.mxu0 %v2341
    %v2440 = vpop.f32.mrf.mxu0
    %v2441 = vadd.f32 %v49, %v2440
    %v2442 = vpop.f32.mrf.mxu0
    %v2443 = vpop.f32.mrf.mxu0
    %v2444 = vpop.f32.mrf.mxu0
    %2445 = vdwg.mxu0
    %v2446 = vmax.f32 %v2441, 0.0
    %vm2447 = vcmask 7168
    %2448 = vst.msk [vmem:[%s9] sm:$0xff] %vm2447, %v2446
    // Predicated region
    $region42: #{tpu_custom_call.1} parent=1 // pred_check
      _
    $region43: #{tpu_custom_call.1} parent=1 // pred_check_branch
      %2450 = sbr.rel (0) target = $region45
    $region44: #{tpu_custom_call.1} parent=1 // pred_region
      _
    $region45: #{tpu_custom_call.1} parent=1 // pred_fallthru
      _
    // Predicated region
    $region46: #{tpu_custom_call.1} parent=1 // pred_check
      _
    $region47: #{tpu_custom_call.1} parent=1 // pred_check_branch
      %2452 = sbr.rel (0) target = $region49
    $region48: #{tpu_custom_call.1} parent=1 // pred_region
      _
    $region49: #{tpu_custom_call.1} parent=1 // pred_fallthru
      _
    %2453 = vsyncpa [#allocation3], 1

</llo_original>
